<compile_context>
chip_gen: v5e
topology: v5e:2x2
jax: 0.10.0
libtpu: 0.0.40
codegen_flags: <defaults>
</compile_context>

<pallas_src>
import functools

import jax
import jax.numpy as jnp
from jax import lax
from jax.experimental import pallas as pl
from jax.experimental.pallas import tpu as pltpu

NEG_SLOPE = 0.2      # GATConv default leaky-relu negative slope
NEG_BIG = -1e30      # mask value; safe because self-loops guarantee >=1 edge per row
C_PAD = 128          # pad class dim to a full lane group (lane-dense stores)


# --------------------------- fused model kernel -----------------------------
def fused_gat_kernel(x_ref, w1_ref, asrc1_ref, adst1_ref, b1_ref,
                     w2_ref, asrc2_ref, adst2_ref, b2_ref,
                     adj_ref, pool_ref, out_ref, h1_ref,
                     *, n_heads, f1, num_classes):
    """Whole forward pass in VMEM.

    x_ref     : [N, Fin]
    w1_ref    : [Fin, H*F1]      fused per-head weights (head h = cols h*F1:(h+1)*F1)
    asrc1_ref : [H, H*F1]        block-diagonal src attention vectors
    adst1_ref : [H, H*F1]        block-diagonal dst attention vectors
    b1_ref    : [1, H*F1]
    w2_ref    : [H*F1, C_PAD]    zero-padded beyond num_classes
    asrc2_ref : [1, C_PAD]
    adst2_ref : [1, C_PAD]
    b2_ref    : [1, C_PAD]
    adj_ref   : [N, N]           adj[dst, src] mask incl. self loops
    pool_ref  : [G, N]           per-graph mean matrix
    out_ref   : [G, C_PAD]       log_softmax (pad lanes are garbage, sliced on host)
    h1_ref    : [N, H*F1]        scratch for layer-1 output
    """
    x = x_ref[...]
    adj = adj_ref[...]
    neg_big = jnp.float32(NEG_BIG)

    # ---------------- layer 1: all heads fused ----------------
    # one MXU matmul for every head's linear transform
    hfeat1 = jnp.dot(x, w1_ref[...], preferred_element_type=jnp.float32)   # [N, H*F1]

    # all-heads attention coefficients with two matmuls (block-diagonal att mats)
    # a_dst_nh[n, h] = <hfeat1[n, head h block], a_dst_h>
    a_dst_nh = lax.dot_general(hfeat1, adst1_ref[...],
                               dimension_numbers=(((1,), (1,)), ((), ())),
                               preferred_element_type=jnp.float32)          # [N, H]
    a_src_hn = lax.dot_general(asrc1_ref[...], hfeat1,
                               dimension_numbers=(((1,), (1,)), ((), ())),
                               preferred_element_type=jnp.float32)          # [H, N]

    for h in range(n_heads):  # small static unroll; only VPU/EUP work + tiny matmul
        # e[dst, src] = leaky_relu(a_dst[dst] + a_src[src]), masked by adjacency
        logits = a_dst_nh[:, h:h + 1] + a_src_hn[h:h + 1, :]                # [N, N]
        logits = jnp.where(logits > 0, logits, NEG_SLOPE * logits)
        logits = jnp.where(adj > 0, logits, neg_big)

        # softmax over incoming edges (src axis); divide -> EUP reciprocal
        m = jnp.max(logits, axis=1, keepdims=True)
        p = jnp.exp(logits - m)
        denom = jnp.sum(p, axis=1, keepdims=True)
        attn = p * pl.reciprocal(denom, approx=True)                        # [N, N]

        out_h = jnp.dot(attn, hfeat1[:, h * f1:(h + 1) * f1],
                        preferred_element_type=jnp.float32)                 # [N, F1]
        out_h = out_h + b1_ref[0:1, h * f1:(h + 1) * f1]
        h1_ref[:, h * f1:(h + 1) * f1] = jnp.maximum(out_h, 0.0)            # ReLU

    h1 = h1_ref[...]                      # [N, H*F1]; dropout = identity (eval)

    # ---------------- layer 2: single head, class dim padded to C_PAD ----------
    hfeat2 = jnp.dot(h1, w2_ref[...], preferred_element_type=jnp.float32)   # [N, C_PAD]
    a_dst2 = jnp.sum(hfeat2 * adst2_ref[...], axis=1, keepdims=True)        # [N, 1]
    a_src2 = lax.dot_general(asrc2_ref[...], hfeat2,
                             dimension_numbers=(((1,), (1,)), ((), ())),
                             preferred_element_type=jnp.float32)            # [1, N]
    logits2 = a_dst2 + a_src2
    logits2 = jnp.where(logits2 > 0, logits2, NEG_SLOPE * logits2)
    logits2 = jnp.where(adj > 0, logits2, neg_big)
    m2 = jnp.max(logits2, axis=1, keepdims=True)
    p2 = jnp.exp(logits2 - m2)
    d2 = jnp.sum(p2, axis=1, keepdims=True)
    attn2 = p2 * pl.reciprocal(d2, approx=True)                             # [N, N]
    h2 = jnp.dot(attn2, hfeat2, preferred_element_type=jnp.float32) + b2_ref[...]

    # ---------------- global mean pool + log_softmax (lane-dense) --------------
    pooled = jnp.dot(pool_ref[...], h2, preferred_element_type=jnp.float32)  # [G, C_PAD]
    col = lax.broadcasted_iota(jnp.int32, pooled.shape, 1)
    pooled = jnp.where(col < num_classes, pooled, neg_big)                   # mask pad lanes
    mm = jnp.max(pooled, axis=1, keepdims=True)
    z = pooled - mm
    lse = jnp.log(jnp.sum(jnp.exp(z), axis=1, keepdims=True))
    out_ref[...] = z - lse


# ------------------------------ model glue ----------------------------------
def glorot(key, shape):
    fan_in, fan_out = shape[-2], shape[-1]
    lim = (6.0 / (fan_in + fan_out)) ** 0.5
    return jax.random.uniform(key, shape, jnp.float32, -lim, lim)


def block_diag_att(a):
    """[H, F] per-head attention vectors -> [H, H*F] block-diagonal matrix."""
    h, f = a.shape
    eye = jnp.eye(h, dtype=a.dtype)
    return (eye[:, :, None] * a[None, :, :]).reshape(h, h * f)


def init_params(key, num_features, num_classes, hdim=64, n_heads=8):
    f1 = hdim // n_heads
    k = jax.random.split(key, 6)
    w2 = glorot(k[3], (hdim, num_classes))
    asrc2 = glorot(k[4], (1, num_classes))
    adst2 = glorot(k[5], (1, num_classes))
    return {
        "w1": glorot(k[0], (num_features, hdim)),                     # fused [Fin, H*F1]
        "asrc1_bd": block_diag_att(glorot(k[1], (n_heads, f1))),      # [H, H*F1]
        "adst1_bd": block_diag_att(glorot(k[2], (n_heads, f1))),      # [H, H*F1]
        "b1": jnp.zeros((1, hdim), jnp.float32),
        "w2": jnp.zeros((hdim, C_PAD), jnp.float32).at[:, :num_classes].set(w2),
        "asrc2": jnp.zeros((1, C_PAD), jnp.float32).at[:, :num_classes].set(asrc2),
        "adst2": jnp.zeros((1, C_PAD), jnp.float32).at[:, :num_classes].set(adst2),
        "b2": jnp.zeros((1, C_PAD), jnp.float32),
    }


def bin_classifier_forward(params, x, edge_index, batch=None, *,
                           num_classes, num_graphs=None, n_heads=8):
    n = x.shape[0]
    hdim = params["w1"].shape[1]
    f1 = hdim // n_heads

    # dense adjacency mask adj[dst, src] with self loops (GATConv default).
    # Self loops also guarantee every softmax row has >=1 unmasked entry.
    adj = jnp.zeros((n, n), jnp.float32)
    adj = adj.at[edge_index[1], edge_index[0]].set(1.0)
    adj = jnp.maximum(adj, jnp.eye(n, dtype=jnp.float32))

    if batch is None:
        g = n
        pool_mat = jnp.eye(n, dtype=jnp.float32)       # per-node log_softmax
    else:
        assert num_graphs is not None, "pass num_graphs as a static Python int"
        g = int(num_graphs)
        onehot = (batch[None, :] == jnp.arange(g, dtype=batch.dtype)[:, None])
        onehot = onehot.astype(jnp.float32)
        pool_mat = onehot / jnp.maximum(jnp.sum(onehot, axis=1, keepdims=True), 1.0)

    kernel = functools.partial(fused_gat_kernel, n_heads=n_heads, f1=f1,
                               num_classes=num_classes)
    vmem = lambda: pl.BlockSpec(memory_space=pltpu.MemorySpace.VMEM)
    out_pad = pl.pallas_call(
        kernel,
        out_shape=jax.ShapeDtypeStruct((g, C_PAD), jnp.float32),
        in_specs=[vmem() for _ in range(11)],
        out_specs=vmem(),
        scratch_shapes=[pltpu.VMEM((n, hdim), jnp.float32)],
    )(x, params["w1"], params["asrc1_bd"], params["adst1_bd"], params["b1"],
      params["w2"], params["asrc2"], params["adst2"], params["b2"],
      adj, pool_mat)
    return out_pad[:, :num_classes]   # drop the lane padding on the host


# --------------------------------- main --------------------------------------
if __name__ == "__main__":
    num_features, num_classes, hdim, n_heads = 16, 2, 64, 8
    N = 16            # nodes total (2 graphs of 8)
    G = 2

    key = jax.random.PRNGKey(0)
    kx, kp = jax.random.split(key)
    x = jax.random.normal(kx, (N, num_features), jnp.float32)

    # ring edges within each graph of 8 nodes, both directions
    src = jnp.arange(N, dtype=jnp.int32)
    dst = (src + 1) % 8 + (src // 8) * 8
    edge_index = jnp.stack([jnp.concatenate([src, dst]),
                            jnp.concatenate([dst, src])])               # [2, 32]
    batch = jnp.concatenate([jnp.zeros(8, jnp.int32), jnp.ones(8, jnp.int32)])

    params = init_params(kp, num_features, num_classes, hdim, n_heads)

    fwd = jax.jit(functools.partial(bin_classifier_forward,
                                    num_classes=num_classes,
                                    num_graphs=G,
                                    n_heads=n_heads))
    out = fwd(params, x, edge_index, batch)
    out = jax.block_until_ready(out)

    # sanity: shape and rows of exp(log_softmax) sum to 1
    assert out.shape == (G, num_classes)
    assert bool(jnp.all(jnp.abs(jnp.sum(jnp.exp(out), axis=1) - 1.0) < 1e-4))
    print("KERNEL_OK")
</pallas_src>

<mosaic_0001>
module attributes {stable_mosaic.version = 11 : i64} {
  func.func @fused_gat_kernel(%arg0: memref<16x16xf32, #tpu.memory_space<vmem>>, %arg1: memref<16x64xf32, #tpu.memory_space<vmem>>, %arg2: memref<8x64xf32, #tpu.memory_space<vmem>>, %arg3: memref<8x64xf32, #tpu.memory_space<vmem>>, %arg4: memref<1x64xf32, #tpu.memory_space<vmem>>, %arg5: memref<64x128xf32, #tpu.memory_space<vmem>>, %arg6: memref<1x128xf32, #tpu.memory_space<vmem>>, %arg7: memref<1x128xf32, #tpu.memory_space<vmem>>, %arg8: memref<1x128xf32, #tpu.memory_space<vmem>>, %arg9: memref<16x16xf32, #tpu.memory_space<vmem>>, %arg10: memref<2x16xf32, #tpu.memory_space<vmem>>, %arg11: memref<2x128xf32, #tpu.memory_space<vmem>>, %arg12: memref<16x64xf32, #tpu.memory_space<vmem>>) attributes {dimension_semantics = [], scalar_prefetch = 0 : i64, scratch_operands = 1 : i64, tpu.core_type = #tpu.core_type<tc>} {
    %c0 = arith.constant 0 : index
    %c0_0 = arith.constant 0 : index
    %0 = vector.load %arg0[%c0, %c0_0] : memref<16x16xf32, #tpu.memory_space<vmem>>, vector<16x16xf32>
    %c0_1 = arith.constant 0 : index
    %c0_2 = arith.constant 0 : index
    %1 = vector.load %arg9[%c0_1, %c0_2] : memref<16x16xf32, #tpu.memory_space<vmem>>, vector<16x16xf32>
    %c0_3 = arith.constant 0 : index
    %c0_4 = arith.constant 0 : index
    %2 = vector.load %arg1[%c0_3, %c0_4] : memref<16x64xf32, #tpu.memory_space<vmem>>, vector<16x64xf32>
    %cst = arith.constant dense<0.000000e+00> : vector<16x64xf32>
    %3 = tpu.matmul %0, %2, %cst {dimension_numbers = #tpu.dot_dimension_numbers<[1], [0], [0], [1], [0, 0, 1, 1], [], []>} : vector<16x16xf32>, vector<16x64xf32>, vector<16x64xf32> -> vector<16x64xf32>
    %c0_5 = arith.constant 0 : index
    %c0_6 = arith.constant 0 : index
    %4 = vector.load %arg3[%c0_5, %c0_6] : memref<8x64xf32, #tpu.memory_space<vmem>>, vector<8x64xf32>
    %cst_7 = arith.constant dense<0.000000e+00> : vector<16x8xf32>
    %5 = tpu.matmul %3, %4, %cst_7 {dimension_numbers = #tpu.dot_dimension_numbers<[1], [1], [0], [0], [0, 0, 1, 0], [], []>} : vector<16x64xf32>, vector<8x64xf32>, vector<16x8xf32> -> vector<16x8xf32>
    %c0_8 = arith.constant 0 : index
    %c0_9 = arith.constant 0 : index
    %6 = vector.load %arg2[%c0_8, %c0_9] : memref<8x64xf32, #tpu.memory_space<vmem>>, vector<8x64xf32>
    %cst_10 = arith.constant dense<0.000000e+00> : vector<8x16xf32>
    %7 = tpu.matmul %6, %3, %cst_10 {dimension_numbers = #tpu.dot_dimension_numbers<[1], [1], [0], [0], [0, 0, 1, 0], [], []>} : vector<8x64xf32>, vector<16x64xf32>, vector<8x16xf32> -> vector<8x16xf32>
    %8 = vector.extract_strided_slice %5 {offsets = [0, 0], sizes = [16, 1], strides = [1, 1]} : vector<16x8xf32> to vector<16x1xf32>
    %9 = vector.extract_strided_slice %7 {offsets = [0, 0], sizes = [1, 16], strides = [1, 1]} : vector<8x16xf32> to vector<1x16xf32>
    %10 = vector.broadcast %8 : vector<16x1xf32> to vector<16x16xf32>
    %11 = vector.broadcast %9 : vector<1x16xf32> to vector<16x16xf32>
    %12 = arith.addf %10, %11 : vector<16x16xf32>
    %cst_11 = arith.constant 0.000000e+00 : f32
    %13 = vector.broadcast %cst_11 : f32 to vector<16x16xf32>
    %14 = arith.cmpf ogt, %12, %13 : vector<16x16xf32>
    %cst_12 = arith.constant 2.000000e-01 : f32
    %15 = vector.broadcast %cst_12 : f32 to vector<16x16xf32>
    %16 = arith.mulf %15, %12 : vector<16x16xf32>
    %17 = arith.select %14, %12, %16 : vector<16x16xi1>, vector<16x16xf32>
    %cst_13 = arith.constant 0.000000e+00 : f32
    %18 = vector.broadcast %cst_13 : f32 to vector<16x16xf32>
    %19 = arith.cmpf ogt, %1, %18 : vector<16x16xf32>
    %cst_14 = arith.constant -1.000000e+30 : f32
    %20 = vector.broadcast %cst_14 : f32 to vector<16x16xf32>
    %21 = arith.select %19, %17, %20 : vector<16x16xi1>, vector<16x16xf32>
    %cst_15 = arith.constant dense<0xFF800000> : vector<16xf32>
    %22 = vector.multi_reduction <maximumf>, %21, %cst_15 [1] : vector<16x16xf32> to vector<16xf32>
    %23 = vector.shape_cast %22 : vector<16xf32> to vector<16x1xf32>
    %24 = vector.broadcast %23 : vector<16x1xf32> to vector<16x16xf32>
    %25 = arith.subf %21, %24 : vector<16x16xf32>
    %26 = math.exp %25 : vector<16x16xf32>
    %cst_16 = arith.constant dense<0.000000e+00> : vector<16xf32>
    %27 = vector.multi_reduction <add>, %26, %cst_16 [1] : vector<16x16xf32> to vector<16xf32>
    %28 = vector.shape_cast %27 : vector<16xf32> to vector<16x1xf32>
    %29 = tpu.reciprocal %28 {approx = true} : vector<16x1xf32> -> vector<16x1xf32>
    %30 = vector.broadcast %29 : vector<16x1xf32> to vector<16x16xf32>
    %31 = arith.mulf %26, %30 : vector<16x16xf32>
    %32 = vector.extract_strided_slice %3 {offsets = [0, 0], sizes = [16, 8], strides = [1, 1]} : vector<16x64xf32> to vector<16x8xf32>
    %cst_17 = arith.constant dense<0.000000e+00> : vector<16x8xf32>
    %33 = tpu.matmul %31, %32, %cst_17 {dimension_numbers = #tpu.dot_dimension_numbers<[1], [0], [0], [1], [0, 0, 1, 1], [], []>} : vector<16x16xf32>, vector<16x8xf32>, vector<16x8xf32> -> vector<16x8xf32>
    %c0_18 = arith.constant 0 : index
    %c0_19 = arith.constant 0 : index
    %34 = vector.load %arg4[%c0_18, %c0_19] : memref<1x64xf32, #tpu.memory_space<vmem>>, vector<1x8xf32>
    %35 = vector.broadcast %34 : vector<1x8xf32> to vector<16x8xf32>
    %36 = arith.addf %33, %35 : vector<16x8xf32>
    %cst_20 = arith.constant 0.000000e+00 : f32
    %37 = vector.broadcast %cst_20 : f32 to vector<16x8xf32>
    %38 = arith.maximumf %36, %37 : vector<16x8xf32>
    %c0_21 = arith.constant 0 : index
    %c0_22 = arith.constant 0 : index
    %39 = vector.load %arg12[%c0_21, %c0_22] : memref<16x64xf32, #tpu.memory_space<vmem>>, vector<16x8xf32>
    tpu.vector_store %arg12[%c0_21, %c0_22], %38 {strides = array<i32>} : memref<16x64xf32, #tpu.memory_space<vmem>>, vector<16x8xf32>,
    %40 = vector.extract_strided_slice %5 {offsets = [0, 1], sizes = [16, 1], strides = [1, 1]} : vector<16x8xf32> to vector<16x1xf32>
    %41 = vector.extract_strided_slice %7 {offsets = [1, 0], sizes = [1, 16], strides = [1, 1]} : vector<8x16xf32> to vector<1x16xf32>
    %42 = vector.broadcast %40 : vector<16x1xf32> to vector<16x16xf32>
    %43 = vector.broadcast %41 : vector<1x16xf32> to vector<16x16xf32>
    %44 = arith.addf %42, %43 : vector<16x16xf32>
    %cst_23 = arith.constant 0.000000e+00 : f32
    %45 = vector.broadcast %cst_23 : f32 to vector<16x16xf32>
    %46 = arith.cmpf ogt, %44, %45 : vector<16x16xf32>
    %cst_24 = arith.constant 2.000000e-01 : f32
    %47 = vector.broadcast %cst_24 : f32 to vector<16x16xf32>
    %48 = arith.mulf %47, %44 : vector<16x16xf32>
    %49 = arith.select %46, %44, %48 : vector<16x16xi1>, vector<16x16xf32>
    %cst_25 = arith.constant 0.000000e+00 : f32
    %50 = vector.broadcast %cst_25 : f32 to vector<16x16xf32>
    %51 = arith.cmpf ogt, %1, %50 : vector<16x16xf32>
    %cst_26 = arith.constant -1.000000e+30 : f32
    %52 = vector.broadcast %cst_26 : f32 to vector<16x16xf32>
    %53 = arith.select %51, %49, %52 : vector<16x16xi1>, vector<16x16xf32>
    %cst_27 = arith.constant dense<0xFF800000> : vector<16xf32>
    %54 = vector.multi_reduction <maximumf>, %53, %cst_27 [1] : vector<16x16xf32> to vector<16xf32>
    %55 = vector.shape_cast %54 : vector<16xf32> to vector<16x1xf32>
    %56 = vector.broadcast %55 : vector<16x1xf32> to vector<16x16xf32>
    %57 = arith.subf %53, %56 : vector<16x16xf32>
    %58 = math.exp %57 : vector<16x16xf32>
    %cst_28 = arith.constant dense<0.000000e+00> : vector<16xf32>
    %59 = vector.multi_reduction <add>, %58, %cst_28 [1] : vector<16x16xf32> to vector<16xf32>
    %60 = vector.shape_cast %59 : vector<16xf32> to vector<16x1xf32>
    %61 = tpu.reciprocal %60 {approx = true} : vector<16x1xf32> -> vector<16x1xf32>
    %62 = vector.broadcast %61 : vector<16x1xf32> to vector<16x16xf32>
    %63 = arith.mulf %58, %62 : vector<16x16xf32>
    %64 = vector.extract_strided_slice %3 {offsets = [0, 8], sizes = [16, 8], strides = [1, 1]} : vector<16x64xf32> to vector<16x8xf32>
    %cst_29 = arith.constant dense<0.000000e+00> : vector<16x8xf32>
    %65 = tpu.matmul %63, %64, %cst_29 {dimension_numbers = #tpu.dot_dimension_numbers<[1], [0], [0], [1], [0, 0, 1, 1], [], []>} : vector<16x16xf32>, vector<16x8xf32>, vector<16x8xf32> -> vector<16x8xf32>
    %c0_30 = arith.constant 0 : index
    %c8 = arith.constant 8 : index
    %66 = vector.load %arg4[%c0_30, %c8] : memref<1x64xf32, #tpu.memory_space<vmem>>, vector<1x8xf32>
    %67 = vector.broadcast %66 : vector<1x8xf32> to vector<16x8xf32>
    %68 = arith.addf %65, %67 : vector<16x8xf32>
    %cst_31 = arith.constant 0.000000e+00 : f32
    %69 = vector.broadcast %cst_31 : f32 to vector<16x8xf32>
    %70 = arith.maximumf %68, %69 : vector<16x8xf32>
    %c0_32 = arith.constant 0 : index
    %c8_33 = arith.constant 8 : index
    %71 = vector.load %arg12[%c0_32, %c8_33] : memref<16x64xf32, #tpu.memory_space<vmem>>, vector<16x8xf32>
    tpu.vector_store %arg12[%c0_32, %c8_33], %70 {strides = array<i32>} : memref<16x64xf32, #tpu.memory_space<vmem>>, vector<16x8xf32>,
    %72 = vector.extract_strided_slice %5 {offsets = [0, 2], sizes = [16, 1], strides = [1, 1]} : vector<16x8xf32> to vector<16x1xf32>
    %73 = vector.extract_strided_slice %7 {offsets = [2, 0], sizes = [1, 16], strides = [1, 1]} : vector<8x16xf32> to vector<1x16xf32>
    %74 = vector.broadcast %72 : vector<16x1xf32> to vector<16x16xf32>
    %75 = vector.broadcast %73 : vector<1x16xf32> to vector<16x16xf32>
    %76 = arith.addf %74, %75 : vector<16x16xf32>
    %cst_34 = arith.constant 0.000000e+00 : f32
    %77 = vector.broadcast %cst_34 : f32 to vector<16x16xf32>
    %78 = arith.cmpf ogt, %76, %77 : vector<16x16xf32>
    %cst_35 = arith.constant 2.000000e-01 : f32
    %79 = vector.broadcast %cst_35 : f32 to vector<16x16xf32>
    %80 = arith.mulf %79, %76 : vector<16x16xf32>
    %81 = arith.select %78, %76, %80 : vector<16x16xi1>, vector<16x16xf32>
    %cst_36 = arith.constant 0.000000e+00 : f32
    %82 = vector.broadcast %cst_36 : f32 to vector<16x16xf32>
    %83 = arith.cmpf ogt, %1, %82 : vector<16x16xf32>
    %cst_37 = arith.constant -1.000000e+30 : f32
    %84 = vector.broadcast %cst_37 : f32 to vector<16x16xf32>
    %85 = arith.select %83, %81, %84 : vector<16x16xi1>, vector<16x16xf32>
    %cst_38 = arith.constant dense<0xFF800000> : vector<16xf32>
    %86 = vector.multi_reduction <maximumf>, %85, %cst_38 [1] : vector<16x16xf32> to vector<16xf32>
    %87 = vector.shape_cast %86 : vector<16xf32> to vector<16x1xf32>
    %88 = vector.broadcast %87 : vector<16x1xf32> to vector<16x16xf32>
    %89 = arith.subf %85, %88 : vector<16x16xf32>
    %90 = math.exp %89 : vector<16x16xf32>
    %cst_39 = arith.constant dense<0.000000e+00> : vector<16xf32>
    %91 = vector.multi_reduction <add>, %90, %cst_39 [1] : vector<16x16xf32> to vector<16xf32>
    %92 = vector.shape_cast %91 : vector<16xf32> to vector<16x1xf32>
    %93 = tpu.reciprocal %92 {approx = true} : vector<16x1xf32> -> vector<16x1xf32>
    %94 = vector.broadcast %93 : vector<16x1xf32> to vector<16x16xf32>
    %95 = arith.mulf %90, %94 : vector<16x16xf32>
    %96 = vector.extract_strided_slice %3 {offsets = [0, 16], sizes = [16, 8], strides = [1, 1]} : vector<16x64xf32> to vector<16x8xf32>
    %cst_40 = arith.constant dense<0.000000e+00> : vector<16x8xf32>
    %97 = tpu.matmul %95, %96, %cst_40 {dimension_numbers = #tpu.dot_dimension_numbers<[1], [0], [0], [1], [0, 0, 1, 1], [], []>} : vector<16x16xf32>, vector<16x8xf32>, vector<16x8xf32> -> vector<16x8xf32>
    %c0_41 = arith.constant 0 : index
    %c16 = arith.constant 16 : index
    %98 = vector.load %arg4[%c0_41, %c16] : memref<1x64xf32, #tpu.memory_space<vmem>>, vector<1x8xf32>
    %99 = vector.broadcast %98 : vector<1x8xf32> to vector<16x8xf32>
    %100 = arith.addf %97, %99 : vector<16x8xf32>
    %cst_42 = arith.constant 0.000000e+00 : f32
    %101 = vector.broadcast %cst_42 : f32 to vector<16x8xf32>
    %102 = arith.maximumf %100, %101 : vector<16x8xf32>
    %c0_43 = arith.constant 0 : index
    %c16_44 = arith.constant 16 : index
    %103 = vector.load %arg12[%c0_43, %c16_44] : memref<16x64xf32, #tpu.memory_space<vmem>>, vector<16x8xf32>
    tpu.vector_store %arg12[%c0_43, %c16_44], %102 {strides = array<i32>} : memref<16x64xf32, #tpu.memory_space<vmem>>, vector<16x8xf32>,
    %104 = vector.extract_strided_slice %5 {offsets = [0, 3], sizes = [16, 1], strides = [1, 1]} : vector<16x8xf32> to vector<16x1xf32>
    %105 = vector.extract_strided_slice %7 {offsets = [3, 0], sizes = [1, 16], strides = [1, 1]} : vector<8x16xf32> to vector<1x16xf32>
    %106 = vector.broadcast %104 : vector<16x1xf32> to vector<16x16xf32>
    %107 = vector.broadcast %105 : vector<1x16xf32> to vector<16x16xf32>
    %108 = arith.addf %106, %107 : vector<16x16xf32>
    %cst_45 = arith.constant 0.000000e+00 : f32
    %109 = vector.broadcast %cst_45 : f32 to vector<16x16xf32>
    %110 = arith.cmpf ogt, %108, %109 : vector<16x16xf32>
    %cst_46 = arith.constant 2.000000e-01 : f32
    %111 = vector.broadcast %cst_46 : f32 to vector<16x16xf32>
    %112 = arith.mulf %111, %108 : vector<16x16xf32>
    %113 = arith.select %110, %108, %112 : vector<16x16xi1>, vector<16x16xf32>
    %cst_47 = arith.constant 0.000000e+00 : f32
    %114 = vector.broadcast %cst_47 : f32 to vector<16x16xf32>
    %115 = arith.cmpf ogt, %1, %114 : vector<16x16xf32>
    %cst_48 = arith.constant -1.000000e+30 : f32
    %116 = vector.broadcast %cst_48 : f32 to vector<16x16xf32>
    %117 = arith.select %115, %113, %116 : vector<16x16xi1>, vector<16x16xf32>
    %cst_49 = arith.constant dense<0xFF800000> : vector<16xf32>
    %118 = vector.multi_reduction <maximumf>, %117, %cst_49 [1] : vector<16x16xf32> to vector<16xf32>
    %119 = vector.shape_cast %118 : vector<16xf32> to vector<16x1xf32>
    %120 = vector.broadcast %119 : vector<16x1xf32> to vector<16x16xf32>
    %121 = arith.subf %117, %120 : vector<16x16xf32>
    %122 = math.exp %121 : vector<16x16xf32>
    %cst_50 = arith.constant dense<0.000000e+00> : vector<16xf32>
    %123 = vector.multi_reduction <add>, %122, %cst_50 [1] : vector<16x16xf32> to vector<16xf32>
    %124 = vector.shape_cast %123 : vector<16xf32> to vector<16x1xf32>
    %125 = tpu.reciprocal %124 {approx = true} : vector<16x1xf32> -> vector<16x1xf32>
    %126 = vector.broadcast %125 : vector<16x1xf32> to vector<16x16xf32>
    %127 = arith.mulf %122, %126 : vector<16x16xf32>
    %128 = vector.extract_strided_slice %3 {offsets = [0, 24], sizes = [16, 8], strides = [1, 1]} : vector<16x64xf32> to vector<16x8xf32>
    %cst_51 = arith.constant dense<0.000000e+00> : vector<16x8xf32>
    %129 = tpu.matmul %127, %128, %cst_51 {dimension_numbers = #tpu.dot_dimension_numbers<[1], [0], [0], [1], [0, 0, 1, 1], [], []>} : vector<16x16xf32>, vector<16x8xf32>, vector<16x8xf32> -> vector<16x8xf32>
    %c0_52 = arith.constant 0 : index
    %c24 = arith.constant 24 : index
    %130 = vector.load %arg4[%c0_52, %c24] : memref<1x64xf32, #tpu.memory_space<vmem>>, vector<1x8xf32>
    %131 = vector.broadcast %130 : vector<1x8xf32> to vector<16x8xf32>
    %132 = arith.addf %129, %131 : vector<16x8xf32>
    %cst_53 = arith.constant 0.000000e+00 : f32
    %133 = vector.broadcast %cst_53 : f32 to vector<16x8xf32>
    %134 = arith.maximumf %132, %133 : vector<16x8xf32>
    %c0_54 = arith.constant 0 : index
    %c24_55 = arith.constant 24 : index
    %135 = vector.load %arg12[%c0_54, %c24_55] : memref<16x64xf32, #tpu.memory_space<vmem>>, vector<16x8xf32>
    tpu.vector_store %arg12[%c0_54, %c24_55], %134 {strides = array<i32>} : memref<16x64xf32, #tpu.memory_space<vmem>>, vector<16x8xf32>,
    %136 = vector.extract_strided_slice %5 {offsets = [0, 4], sizes = [16, 1], strides = [1, 1]} : vector<16x8xf32> to vector<16x1xf32>
    %137 = vector.extract_strided_slice %7 {offsets = [4, 0], sizes = [1, 16], strides = [1, 1]} : vector<8x16xf32> to vector<1x16xf32>
    %138 = vector.broadcast %136 : vector<16x1xf32> to vector<16x16xf32>
    %139 = vector.broadcast %137 : vector<1x16xf32> to vector<16x16xf32>
    %140 = arith.addf %138, %139 : vector<16x16xf32>
    %cst_56 = arith.constant 0.000000e+00 : f32
    %141 = vector.broadcast %cst_56 : f32 to vector<16x16xf32>
    %142 = arith.cmpf ogt, %140, %141 : vector<16x16xf32>
    %cst_57 = arith.constant 2.000000e-01 : f32
    %143 = vector.broadcast %cst_57 : f32 to vector<16x16xf32>
    %144 = arith.mulf %143, %140 : vector<16x16xf32>
    %145 = arith.select %142, %140, %144 : vector<16x16xi1>, vector<16x16xf32>
    %cst_58 = arith.constant 0.000000e+00 : f32
    %146 = vector.broadcast %cst_58 : f32 to vector<16x16xf32>
    %147 = arith.cmpf ogt, %1, %146 : vector<16x16xf32>
    %cst_59 = arith.constant -1.000000e+30 : f32
    %148 = vector.broadcast %cst_59 : f32 to vector<16x16xf32>
    %149 = arith.select %147, %145, %148 : vector<16x16xi1>, vector<16x16xf32>
    %cst_60 = arith.constant dense<0xFF800000> : vector<16xf32>
    %150 = vector.multi_reduction <maximumf>, %149, %cst_60 [1] : vector<16x16xf32> to vector<16xf32>
    %151 = vector.shape_cast %150 : vector<16xf32> to vector<16x1xf32>
    %152 = vector.broadcast %151 : vector<16x1xf32> to vector<16x16xf32>
    %153 = arith.subf %149, %152 : vector<16x16xf32>
    %154 = math.exp %153 : vector<16x16xf32>
    %cst_61 = arith.constant dense<0.000000e+00> : vector<16xf32>
    %155 = vector.multi_reduction <add>, %154, %cst_61 [1] : vector<16x16xf32> to vector<16xf32>
    %156 = vector.shape_cast %155 : vector<16xf32> to vector<16x1xf32>
    %157 = tpu.reciprocal %156 {approx = true} : vector<16x1xf32> -> vector<16x1xf32>
    %158 = vector.broadcast %157 : vector<16x1xf32> to vector<16x16xf32>
    %159 = arith.mulf %154, %158 : vector<16x16xf32>
    %160 = vector.extract_strided_slice %3 {offsets = [0, 32], sizes = [16, 8], strides = [1, 1]} : vector<16x64xf32> to vector<16x8xf32>
    %cst_62 = arith.constant dense<0.000000e+00> : vector<16x8xf32>
    %161 = tpu.matmul %159, %160, %cst_62 {dimension_numbers = #tpu.dot_dimension_numbers<[1], [0], [0], [1], [0, 0, 1, 1], [], []>} : vector<16x16xf32>, vector<16x8xf32>, vector<16x8xf32> -> vector<16x8xf32>
    %c0_63 = arith.constant 0 : index
    %c32 = arith.constant 32 : index
    %162 = vector.load %arg4[%c0_63, %c32] : memref<1x64xf32, #tpu.memory_space<vmem>>, vector<1x8xf32>
    %163 = vector.broadcast %162 : vector<1x8xf32> to vector<16x8xf32>
    %164 = arith.addf %161, %163 : vector<16x8xf32>
    %cst_64 = arith.constant 0.000000e+00 : f32
    %165 = vector.broadcast %cst_64 : f32 to vector<16x8xf32>
    %166 = arith.maximumf %164, %165 : vector<16x8xf32>
    %c0_65 = arith.constant 0 : index
    %c32_66 = arith.constant 32 : index
    %167 = vector.load %arg12[%c0_65, %c32_66] : memref<16x64xf32, #tpu.memory_space<vmem>>, vector<16x8xf32>
    tpu.vector_store %arg12[%c0_65, %c32_66], %166 {strides = array<i32>} : memref<16x64xf32, #tpu.memory_space<vmem>>, vector<16x8xf32>,
    %168 = vector.extract_strided_slice %5 {offsets = [0, 5], sizes = [16, 1], strides = [1, 1]} : vector<16x8xf32> to vector<16x1xf32>
    %169 = vector.extract_strided_slice %7 {offsets = [5, 0], sizes = [1, 16], strides = [1, 1]} : vector<8x16xf32> to vector<1x16xf32>
    %170 = vector.broadcast %168 : vector<16x1xf32> to vector<16x16xf32>
    %171 = vector.broadcast %169 : vector<1x16xf32> to vector<16x16xf32>
    %172 = arith.addf %170, %171 : vector<16x16xf32>
    %cst_67 = arith.constant 0.000000e+00 : f32
    %173 = vector.broadcast %cst_67 : f32 to vector<16x16xf32>
    %174 = arith.cmpf ogt, %172, %173 : vector<16x16xf32>
    %cst_68 = arith.constant 2.000000e-01 : f32
    %175 = vector.broadcast %cst_68 : f32 to vector<16x16xf32>
    %176 = arith.mulf %175, %172 : vector<16x16xf32>
    %177 = arith.select %174, %172, %176 : vector<16x16xi1>, vector<16x16xf32>
    %cst_69 = arith.constant 0.000000e+00 : f32
    %178 = vector.broadcast %cst_69 : f32 to vector<16x16xf32>
    %179 = arith.cmpf ogt, %1, %178 : vector<16x16xf32>
    %cst_70 = arith.constant -1.000000e+30 : f32
    %180 = vector.broadcast %cst_70 : f32 to vector<16x16xf32>
    %181 = arith.select %179, %177, %180 : vector<16x16xi1>, vector<16x16xf32>
    %cst_71 = arith.constant dense<0xFF800000> : vector<16xf32>
    %182 = vector.multi_reduction <maximumf>, %181, %cst_71 [1] : vector<16x16xf32> to vector<16xf32>
    %183 = vector.shape_cast %182 : vector<16xf32> to vector<16x1xf32>
    %184 = vector.broadcast %183 : vector<16x1xf32> to vector<16x16xf32>
    %185 = arith.subf %181, %184 : vector<16x16xf32>
    %186 = math.exp %185 : vector<16x16xf32>
    %cst_72 = arith.constant dense<0.000000e+00> : vector<16xf32>
    %187 = vector.multi_reduction <add>, %186, %cst_72 [1] : vector<16x16xf32> to vector<16xf32>
    %188 = vector.shape_cast %187 : vector<16xf32> to vector<16x1xf32>
    %189 = tpu.reciprocal %188 {approx = true} : vector<16x1xf32> -> vector<16x1xf32>
    %190 = vector.broadcast %189 : vector<16x1xf32> to vector<16x16xf32>
    %191 = arith.mulf %186, %190 : vector<16x16xf32>
    %192 = vector.extract_strided_slice %3 {offsets = [0, 40], sizes = [16, 8], strides = [1, 1]} : vector<16x64xf32> to vector<16x8xf32>
    %cst_73 = arith.constant dense<0.000000e+00> : vector<16x8xf32>
    %193 = tpu.matmul %191, %192, %cst_73 {dimension_numbers = #tpu.dot_dimension_numbers<[1], [0], [0], [1], [0, 0, 1, 1], [], []>} : vector<16x16xf32>, vector<16x8xf32>, vector<16x8xf32> -> vector<16x8xf32>
    %c0_74 = arith.constant 0 : index
    %c40 = arith.constant 40 : index
    %194 = vector.load %arg4[%c0_74, %c40] : memref<1x64xf32, #tpu.memory_space<vmem>>, vector<1x8xf32>
    %195 = vector.broadcast %194 : vector<1x8xf32> to vector<16x8xf32>
    %196 = arith.addf %193, %195 : vector<16x8xf32>
    %cst_75 = arith.constant 0.000000e+00 : f32
    %197 = vector.broadcast %cst_75 : f32 to vector<16x8xf32>
    %198 = arith.maximumf %196, %197 : vector<16x8xf32>
    %c0_76 = arith.constant 0 : index
    %c40_77 = arith.constant 40 : index
    %199 = vector.load %arg12[%c0_76, %c40_77] : memref<16x64xf32, #tpu.memory_space<vmem>>, vector<16x8xf32>
    tpu.vector_store %arg12[%c0_76, %c40_77], %198 {strides = array<i32>} : memref<16x64xf32, #tpu.memory_space<vmem>>, vector<16x8xf32>,
    %200 = vector.extract_strided_slice %5 {offsets = [0, 6], sizes = [16, 1], strides = [1, 1]} : vector<16x8xf32> to vector<16x1xf32>
    %201 = vector.extract_strided_slice %7 {offsets = [6, 0], sizes = [1, 16], strides = [1, 1]} : vector<8x16xf32> to vector<1x16xf32>
    %202 = vector.broadcast %200 : vector<16x1xf32> to vector<16x16xf32>
    %203 = vector.broadcast %201 : vector<1x16xf32> to vector<16x16xf32>
    %204 = arith.addf %202, %203 : vector<16x16xf32>
    %cst_78 = arith.constant 0.000000e+00 : f32
    %205 = vector.broadcast %cst_78 : f32 to vector<16x16xf32>
    %206 = arith.cmpf ogt, %204, %205 : vector<16x16xf32>
    %cst_79 = arith.constant 2.000000e-01 : f32
    %207 = vector.broadcast %cst_79 : f32 to vector<16x16xf32>
    %208 = arith.mulf %207, %204 : vector<16x16xf32>
    %209 = arith.select %206, %204, %208 : vector<16x16xi1>, vector<16x16xf32>
    %cst_80 = arith.constant 0.000000e+00 : f32
    %210 = vector.broadcast %cst_80 : f32 to vector<16x16xf32>
    %211 = arith.cmpf ogt, %1, %210 : vector<16x16xf32>
    %cst_81 = arith.constant -1.000000e+30 : f32
    %212 = vector.broadcast %cst_81 : f32 to vector<16x16xf32>
    %213 = arith.select %211, %209, %212 : vector<16x16xi1>, vector<16x16xf32>
    %cst_82 = arith.constant dense<0xFF800000> : vector<16xf32>
    %214 = vector.multi_reduction <maximumf>, %213, %cst_82 [1] : vector<16x16xf32> to vector<16xf32>
    %215 = vector.shape_cast %214 : vector<16xf32> to vector<16x1xf32>
    %216 = vector.broadcast %215 : vector<16x1xf32> to vector<16x16xf32>
    %217 = arith.subf %213, %216 : vector<16x16xf32>
    %218 = math.exp %217 : vector<16x16xf32>
    %cst_83 = arith.constant dense<0.000000e+00> : vector<16xf32>
    %219 = vector.multi_reduction <add>, %218, %cst_83 [1] : vector<16x16xf32> to vector<16xf32>
    %220 = vector.shape_cast %219 : vector<16xf32> to vector<16x1xf32>
    %221 = tpu.reciprocal %220 {approx = true} : vector<16x1xf32> -> vector<16x1xf32>
    %222 = vector.broadcast %221 : vector<16x1xf32> to vector<16x16xf32>
    %223 = arith.mulf %218, %222 : vector<16x16xf32>
    %224 = vector.extract_strided_slice %3 {offsets = [0, 48], sizes = [16, 8], strides = [1, 1]} : vector<16x64xf32> to vector<16x8xf32>
    %cst_84 = arith.constant dense<0.000000e+00> : vector<16x8xf32>
    %225 = tpu.matmul %223, %224, %cst_84 {dimension_numbers = #tpu.dot_dimension_numbers<[1], [0], [0], [1], [0, 0, 1, 1], [], []>} : vector<16x16xf32>, vector<16x8xf32>, vector<16x8xf32> -> vector<16x8xf32>
    %c0_85 = arith.constant 0 : index
    %c48 = arith.constant 48 : index
    %226 = vector.load %arg4[%c0_85, %c48] : memref<1x64xf32, #tpu.memory_space<vmem>>, vector<1x8xf32>
    %227 = vector.broadcast %226 : vector<1x8xf32> to vector<16x8xf32>
    %228 = arith.addf %225, %227 : vector<16x8xf32>
    %cst_86 = arith.constant 0.000000e+00 : f32
    %229 = vector.broadcast %cst_86 : f32 to vector<16x8xf32>
    %230 = arith.maximumf %228, %229 : vector<16x8xf32>
    %c0_87 = arith.constant 0 : index
    %c48_88 = arith.constant 48 : index
    %231 = vector.load %arg12[%c0_87, %c48_88] : memref<16x64xf32, #tpu.memory_space<vmem>>, vector<16x8xf32>
    tpu.vector_store %arg12[%c0_87, %c48_88], %230 {strides = array<i32>} : memref<16x64xf32, #tpu.memory_space<vmem>>, vector<16x8xf32>,
    %232 = vector.extract_strided_slice %5 {offsets = [0, 7], sizes = [16, 1], strides = [1, 1]} : vector<16x8xf32> to vector<16x1xf32>
    %233 = vector.extract_strided_slice %7 {offsets = [7, 0], sizes = [1, 16], strides = [1, 1]} : vector<8x16xf32> to vector<1x16xf32>
    %234 = vector.broadcast %232 : vector<16x1xf32> to vector<16x16xf32>
    %235 = vector.broadcast %233 : vector<1x16xf32> to vector<16x16xf32>
    %236 = arith.addf %234, %235 : vector<16x16xf32>
    %cst_89 = arith.constant 0.000000e+00 : f32
    %237 = vector.broadcast %cst_89 : f32 to vector<16x16xf32>
    %238 = arith.cmpf ogt, %236, %237 : vector<16x16xf32>
    %cst_90 = arith.constant 2.000000e-01 : f32
    %239 = vector.broadcast %cst_90 : f32 to vector<16x16xf32>
    %240 = arith.mulf %239, %236 : vector<16x16xf32>
    %241 = arith.select %238, %236, %240 : vector<16x16xi1>, vector<16x16xf32>
    %cst_91 = arith.constant 0.000000e+00 : f32
    %242 = vector.broadcast %cst_91 : f32 to vector<16x16xf32>
    %243 = arith.cmpf ogt, %1, %242 : vector<16x16xf32>
    %cst_92 = arith.constant -1.000000e+30 : f32
    %244 = vector.broadcast %cst_92 : f32 to vector<16x16xf32>
    %245 = arith.select %243, %241, %244 : vector<16x16xi1>, vector<16x16xf32>
    %cst_93 = arith.constant dense<0xFF800000> : vector<16xf32>
    %246 = vector.multi_reduction <maximumf>, %245, %cst_93 [1] : vector<16x16xf32> to vector<16xf32>
    %247 = vector.shape_cast %246 : vector<16xf32> to vector<16x1xf32>
    %248 = vector.broadcast %247 : vector<16x1xf32> to vector<16x16xf32>
    %249 = arith.subf %245, %248 : vector<16x16xf32>
    %250 = math.exp %249 : vector<16x16xf32>
    %cst_94 = arith.constant dense<0.000000e+00> : vector<16xf32>
    %251 = vector.multi_reduction <add>, %250, %cst_94 [1] : vector<16x16xf32> to vector<16xf32>
    %252 = vector.shape_cast %251 : vector<16xf32> to vector<16x1xf32>
    %253 = tpu.reciprocal %252 {approx = true} : vector<16x1xf32> -> vector<16x1xf32>
    %254 = vector.broadcast %253 : vector<16x1xf32> to vector<16x16xf32>
    %255 = arith.mulf %250, %254 : vector<16x16xf32>
    %256 = vector.extract_strided_slice %3 {offsets = [0, 56], sizes = [16, 8], strides = [1, 1]} : vector<16x64xf32> to vector<16x8xf32>
    %cst_95 = arith.constant dense<0.000000e+00> : vector<16x8xf32>
    %257 = tpu.matmul %255, %256, %cst_95 {dimension_numbers = #tpu.dot_dimension_numbers<[1], [0], [0], [1], [0, 0, 1, 1], [], []>} : vector<16x16xf32>, vector<16x8xf32>, vector<16x8xf32> -> vector<16x8xf32>
    %c0_96 = arith.constant 0 : index
    %c56 = arith.constant 56 : index
    %258 = vector.load %arg4[%c0_96, %c56] : memref<1x64xf32, #tpu.memory_space<vmem>>, vector<1x8xf32>
    %259 = vector.broadcast %258 : vector<1x8xf32> to vector<16x8xf32>
    %260 = arith.addf %257, %259 : vector<16x8xf32>
    %cst_97 = arith.constant 0.000000e+00 : f32
    %261 = vector.broadcast %cst_97 : f32 to vector<16x8xf32>
    %262 = arith.maximumf %260, %261 : vector<16x8xf32>
    %c0_98 = arith.constant 0 : index
    %c56_99 = arith.constant 56 : index
    %263 = vector.load %arg12[%c0_98, %c56_99] : memref<16x64xf32, #tpu.memory_space<vmem>>, vector<16x8xf32>
    tpu.vector_store %arg12[%c0_98, %c56_99], %262 {strides = array<i32>} : memref<16x64xf32, #tpu.memory_space<vmem>>, vector<16x8xf32>,
    %c0_100 = arith.constant 0 : index
    %c0_101 = arith.constant 0 : index
    %264 = vector.load %arg12[%c0_100, %c0_101] : memref<16x64xf32, #tpu.memory_space<vmem>>, vector<16x64xf32>
    %c0_102 = arith.constant 0 : index
    %c0_103 = arith.constant 0 : index
    %265 = vector.load %arg5[%c0_102, %c0_103] : memref<64x128xf32, #tpu.memory_space<vmem>>, vector<64x128xf32>
    %cst_104 = arith.constant dense<0.000000e+00> : vector<16x128xf32>
    %266 = tpu.matmul %264, %265, %cst_104 {dimension_numbers = #tpu.dot_dimension_numbers<[1], [0], [0], [1], [0, 0, 1, 1], [], []>} : vector<16x64xf32>, vector<64x128xf32>, vector<16x128xf32> -> vector<16x128xf32>
    %c0_105 = arith.constant 0 : index
    %c0_106 = arith.constant 0 : index
    %267 = vector.load %arg7[%c0_105, %c0_106] : memref<1x128xf32, #tpu.memory_space<vmem>>, vector<1x128xf32>
    %268 = vector.broadcast %267 : vector<1x128xf32> to vector<16x128xf32>
    %269 = arith.mulf %266, %268 : vector<16x128xf32>
    %cst_107 = arith.constant dense<0.000000e+00> : vector<16xf32>
    %270 = vector.multi_reduction <add>, %269, %cst_107 [1] : vector<16x128xf32> to vector<16xf32>
    %271 = vector.shape_cast %270 : vector<16xf32> to vector<16x1xf32>
    %c0_108 = arith.constant 0 : index
    %c0_109 = arith.constant 0 : index
    %272 = vector.load %arg6[%c0_108, %c0_109] : memref<1x128xf32, #tpu.memory_space<vmem>>, vector<1x128xf32>
    %cst_110 = arith.constant dense<0.000000e+00> : vector<1x16xf32>
    %273 = tpu.matmul %272, %266, %cst_110 {dimension_numbers = #tpu.dot_dimension_numbers<[1], [1], [0], [0], [0, 0, 1, 0], [], []>} : vector<1x128xf32>, vector<16x128xf32>, vector<1x16xf32> -> vector<1x16xf32>
    %274 = vector.broadcast %271 : vector<16x1xf32> to vector<16x16xf32>
    %275 = vector.broadcast %273 : vector<1x16xf32> to vector<16x16xf32>
    %276 = arith.addf %274, %275 : vector<16x16xf32>
    %cst_111 = arith.constant 0.000000e+00 : f32
    %277 = vector.broadcast %cst_111 : f32 to vector<16x16xf32>
    %278 = arith.cmpf ogt, %276, %277 : vector<16x16xf32>
    %cst_112 = arith.constant 2.000000e-01 : f32
    %279 = vector.broadcast %cst_112 : f32 to vector<16x16xf32>
    %280 = arith.mulf %279, %276 : vector<16x16xf32>
    %281 = arith.select %278, %276, %280 : vector<16x16xi1>, vector<16x16xf32>
    %cst_113 = arith.constant 0.000000e+00 : f32
    %282 = vector.broadcast %cst_113 : f32 to vector<16x16xf32>
    %283 = arith.cmpf ogt, %1, %282 : vector<16x16xf32>
    %cst_114 = arith.constant -1.000000e+30 : f32
    %284 = vector.broadcast %cst_114 : f32 to vector<16x16xf32>
    %285 = arith.select %283, %281, %284 : vector<16x16xi1>, vector<16x16xf32>
    %cst_115 = arith.constant dense<0xFF800000> : vector<16xf32>
    %286 = vector.multi_reduction <maximumf>, %285, %cst_115 [1] : vector<16x16xf32> to vector<16xf32>
    %287 = vector.shape_cast %286 : vector<16xf32> to vector<16x1xf32>
    %288 = vector.broadcast %287 : vector<16x1xf32> to vector<16x16xf32>
    %289 = arith.subf %285, %288 : vector<16x16xf32>
    %290 = math.exp %289 : vector<16x16xf32>
    %cst_116 = arith.constant dense<0.000000e+00> : vector<16xf32>
    %291 = vector.multi_reduction <add>, %290, %cst_116 [1] : vector<16x16xf32> to vector<16xf32>
    %292 = vector.shape_cast %291 : vector<16xf32> to vector<16x1xf32>
    %293 = tpu.reciprocal %292 {approx = true} : vector<16x1xf32> -> vector<16x1xf32>
    %294 = vector.broadcast %293 : vector<16x1xf32> to vector<16x16xf32>
    %295 = arith.mulf %290, %294 : vector<16x16xf32>
    %cst_117 = arith.constant dense<0.000000e+00> : vector<16x128xf32>
    %296 = tpu.matmul %295, %266, %cst_117 {dimension_numbers = #tpu.dot_dimension_numbers<[1], [0], [0], [1], [0, 0, 1, 1], [], []>} : vector<16x16xf32>, vector<16x128xf32>, vector<16x128xf32> -> vector<16x128xf32>
    %c0_118 = arith.constant 0 : index
    %c0_119 = arith.constant 0 : index
    %297 = vector.load %arg8[%c0_118, %c0_119] : memref<1x128xf32, #tpu.memory_space<vmem>>, vector<1x128xf32>
    %298 = vector.broadcast %297 : vector<1x128xf32> to vector<16x128xf32>
    %299 = arith.addf %296, %298 : vector<16x128xf32>
    %c0_120 = arith.constant 0 : index
    %c0_121 = arith.constant 0 : index
    %300 = vector.load %arg10[%c0_120, %c0_121] : memref<2x16xf32, #tpu.memory_space<vmem>>, vector<2x16xf32>
    %cst_122 = arith.constant dense<0.000000e+00> : vector<2x128xf32>
    %301 = tpu.matmul %300, %299, %cst_122 {dimension_numbers = #tpu.dot_dimension_numbers<[1], [0], [0], [1], [0, 0, 1, 1], [], []>} : vector<2x16xf32>, vector<16x128xf32>, vector<2x128xf32> -> vector<2x128xf32>
    %302 = tpu.iota {dimensions = array<i32: 1>} : vector<2x128xi32>
    %c2_i32 = arith.constant 2 : i32
    %303 = vector.broadcast %c2_i32 : i32 to vector<2x128xi32>
    %304 = arith.cmpi slt, %302, %303 : vector<2x128xi32>
    %cst_123 = arith.constant -1.000000e+30 : f32
    %305 = vector.broadcast %cst_123 : f32 to vector<2x128xf32>
    %306 = arith.select %304, %301, %305 : vector<2x128xi1>, vector<2x128xf32>
    %cst_124 = arith.constant dense<0xFF800000> : vector<2xf32>
    %307 = vector.multi_reduction <maximumf>, %306, %cst_124 [1] : vector<2x128xf32> to vector<2xf32>
    %308 = vector.shape_cast %307 : vector<2xf32> to vector<2x1xf32>
    %309 = vector.broadcast %308 : vector<2x1xf32> to vector<2x128xf32>
    %310 = arith.subf %306, %309 : vector<2x128xf32>
    %311 = math.exp %310 : vector<2x128xf32>
    %cst_125 = arith.constant dense<0.000000e+00> : vector<2xf32>
    %312 = vector.multi_reduction <add>, %311, %cst_125 [1] : vector<2x128xf32> to vector<2xf32>
    %313 = vector.shape_cast %312 : vector<2xf32> to vector<2x1xf32>
    %314 = math.log %313 : vector<2x1xf32>
    %315 = vector.broadcast %314 : vector<2x1xf32> to vector<2x128xf32>
    %316 = arith.subf %310, %315 : vector<2x128xf32>
    %c0_126 = arith.constant 0 : index
    %c0_127 = arith.constant 0 : index
    %317 = vector.load %arg11[%c0_126, %c0_127] : memref<2x128xf32, #tpu.memory_space<vmem>>, vector<2x128xf32>
    tpu.vector_store %arg11[%c0_126, %c0_127], %316 {strides = array<i32>} : memref<2x128xf32, #tpu.memory_space<vmem>>, vector<2x128xf32>,
    return
  }
}

</mosaic_0001>

<llo_original>
// kernel: bin_classifier_forward.1
$region0: #{bin_classifier_forward.1}
  #allocation0 [shape = 'u32[]', space=smem, size = 0x4, offset = 0x4, fixed_abs, tag = 'smem constant byte address 0x4 - core index']
  #allocation1 [shape = 'u32[72,128]{1,0:T(1,128)}', space=vmem, size = 0x9000, scoped, tag = 'internal scratch']
  #allocation2 [shape = 'f32[16,64]{1,0:T(8,128)}', space=vmem, size = 0x2000, scoped, tag = 'scratch operand']
  %s0 = inlined_call_operand.vmem [shape: f32[16,16], index: 0, kind: input, shape index: {}]
  %s1 = inlined_call_operand.vmem [shape: f32[16,64], index: 1, kind: input, shape index: {}]
  %s2 = inlined_call_operand.vmem [shape: f32[8,64], index: 2, kind: input, shape index: {}]
  %s3 = inlined_call_operand.vmem [shape: f32[8,64], index: 3, kind: input, shape index: {}]
  %s4 = inlined_call_operand.vmem [shape: f32[1,64], index: 4, kind: input, shape index: {}]
  %s5 = inlined_call_operand.vmem [shape: f32[64,128], index: 5, kind: input, shape index: {}]
  %s6 = inlined_call_operand.vmem [shape: f32[1,128], index: 6, kind: input, shape index: {}]
  %s7 = inlined_call_operand.vmem [shape: f32[1,128], index: 7, kind: input, shape index: {}]
  %s8 = inlined_call_operand.vmem [shape: f32[1,128], index: 8, kind: input, shape index: {}]
  %s9 = inlined_call_operand.vmem [shape: f32[16,16], index: 9, kind: input, shape index: {}]
  %s10 = inlined_call_operand.vmem [shape: f32[2,16], index: 10, kind: input, shape index: {}]
  %s11 = inlined_call_operand.hbm [shape: f32[2,128], index: 11, kind: output, shape index: {}]
  %s12 = sld [smem:[#allocation0]]
  $region54: #{bin_classifier_forward.1} parent=0
    _
  %s14 = ssub.s32 1, %s12
  %s15 = scalar_select 0, %s14, %s12
  $region1: #{bin_classifier_forward.1} parent=0
    #allocation3 [shape = 'u8[1024]{0}', space=vmem, size = 0x400, scoped, tag = 'output window, operand 0, single buffered']
    #allocation4 [shape = 's32[1]{0}', space=sflag, size = 0x4, scoped, tag = 'scoped memory for bin_classifier_forward.1']
    %16 = vsyncpa [#allocation4], 0
    // Predicated region
    $region2: #{bin_classifier_forward.1} parent=1 // pred_check
      _
    $region3: #{bin_classifier_forward.1} parent=1 // pred_check_branch
      %18 = sbr.rel (0) target = $region5
    $region4: #{bin_classifier_forward.1} parent=1 // pred_region
      _
    $region5: #{bin_classifier_forward.1} parent=1 // pred_fallthru
      _
    // Predicated region
    $region6: #{bin_classifier_forward.1} parent=1 // pred_check
      _
    $region7: #{bin_classifier_forward.1} parent=1 // pred_check_branch
      %20 = sbr.rel (0) target = $region9
    $region8: #{bin_classifier_forward.1} parent=1 // pred_region
      _
    $region9: #{bin_classifier_forward.1} parent=1 // pred_fallthru
      _
    // Predicated region
    $region10: #{bin_classifier_forward.1} parent=1 // pred_check
      _
    $region11: #{bin_classifier_forward.1} parent=1 // pred_check_branch
      %22 = sbr.rel (0) target = $region13
    $region12: #{bin_classifier_forward.1} parent=1 // pred_region
      _
    $region13: #{bin_classifier_forward.1} parent=1 // pred_fallthru
      _
    // Predicated region
    $region14: #{bin_classifier_forward.1} parent=1 // pred_check
      _
    $region15: #{bin_classifier_forward.1} parent=1 // pred_check_branch
      %24 = sbr.rel (0) target = $region17
    $region16: #{bin_classifier_forward.1} parent=1 // pred_region
      _
    $region17: #{bin_classifier_forward.1} parent=1 // pred_fallthru
      _
    // Predicated region
    $region18: #{bin_classifier_forward.1} parent=1 // pred_check
      _
    $region19: #{bin_classifier_forward.1} parent=1 // pred_check_branch
      %26 = sbr.rel (0) target = $region21
    $region20: #{bin_classifier_forward.1} parent=1 // pred_region
      _
    $region21: #{bin_classifier_forward.1} parent=1 // pred_fallthru
      _
    // Predicated region
    $region22: #{bin_classifier_forward.1} parent=1 // pred_check
      _
    $region23: #{bin_classifier_forward.1} parent=1 // pred_check_branch
      %28 = sbr.rel (0) target = $region25
    $region24: #{bin_classifier_forward.1} parent=1 // pred_region
      _
    $region25: #{bin_classifier_forward.1} parent=1 // pred_fallthru
      _
    // Predicated region
    $region26: #{bin_classifier_forward.1} parent=1 // pred_check
      _
    $region27: #{bin_classifier_forward.1} parent=1 // pred_check_branch
      %30 = sbr.rel (0) target = $region29
    $region28: #{bin_classifier_forward.1} parent=1 // pred_region
      _
    $region29: #{bin_classifier_forward.1} parent=1 // pred_fallthru
      _
    // Predicated region
    $region30: #{bin_classifier_forward.1} parent=1 // pred_check
      _
    $region31: #{bin_classifier_forward.1} parent=1 // pred_check_branch
      %32 = sbr.rel (0) target = $region33
    $region32: #{bin_classifier_forward.1} parent=1 // pred_region
      _
    $region33: #{bin_classifier_forward.1} parent=1 // pred_fallthru
      _
    // Predicated region
    $region34: #{bin_classifier_forward.1} parent=1 // pred_check
      _
    $region35: #{bin_classifier_forward.1} parent=1 // pred_check_branch
      %34 = sbr.rel (0) target = $region37
    $region36: #{bin_classifier_forward.1} parent=1 // pred_region
      _
    $region37: #{bin_classifier_forward.1} parent=1 // pred_fallthru
      _
    // Predicated region
    $region38: #{bin_classifier_forward.1} parent=1 // pred_check
      _
    $region39: #{bin_classifier_forward.1} parent=1 // pred_check_branch
      %36 = sbr.rel (0) target = $region41
    $region40: #{bin_classifier_forward.1} parent=1 // pred_region
      _
    $region41: #{bin_classifier_forward.1} parent=1 // pred_fallthru
      _
    // Predicated region
    $region42: #{bin_classifier_forward.1} parent=1 // pred_check
      _
    $region43: #{bin_classifier_forward.1} parent=1 // pred_check_branch
      %38 = sbr.rel (0) target = $region45
    $region44: #{bin_classifier_forward.1} parent=1 // pred_region
      _
    $region45: #{bin_classifier_forward.1} parent=1 // pred_fallthru
      _
    %v39 = vld [vmem:[%s0] sm:$0xff]
    %v40 = vld [vmem:[%s0 + $0x8] sm:$0xff]
    %v41 = vld [vmem:[%s9] sm:$0xff]
    %v42 = vld [vmem:[%s9 + $0x8] sm:$0xff]
    %v43 = vld [vmem:[%s1] sm:$0xff]
    %v44 = vld [vmem:[%s1 + $0x8] sm:$0xff]
    %vm45 = vcmask 130048
    %v47 = vsel %vm45, %v39, 0
    %v50 = vsel %vm45, %v40, 0
    %52 = vmatpush.msra.mxu0 0.0
    %53 = vmatpush.msra.mxu0 0.0
    %54 = vmatpush.msra.mxu0 0.0
    %55 = vmatpush.msra.mxu0 0.0
    %56 = vmatpush.msra.mxu0 0.0
    %57 = vmatpush.msra.mxu0 0.0
    %58 = vmatpush.msra.mxu0 0.0
    %59 = vmatpush.msra.mxu0 0.0
    %60 = vmatpush.msra.mxu0 0.0
    %61 = vmatpush.msra.mxu0 0.0
    %62 = vmatpush.msra.mxu0 0.0
    %63 = vmatpush.msra.mxu0 0.0
    %64 = vmatpush.msra.mxu0 0.0
    %65 = vmatpush.msra.mxu0 0.0
    %66 = vmatpush.msra.mxu0 %v44
    %67 = vmatpush.msra.mxu0 %v43
    %68 = vmatmul.f32.gmra.mxu0 %v47
    %v69 = vpop.f32.mrf.mxu0
    %v70 = vadd.f32 0.0, %v69
    %71 = vmatmul.f32.gmra.mxu0 %v50
    %v72 = vpop.f32.mrf.mxu0
    %v73 = vadd.f32 0.0, %v72
    %74 = vdwg.mxu0
    %v75 = vld [vmem:[%s3] sm:$0xff]
    %vm76 = vcmask 523264
    %v78 = vsel %vm76, %v70, 0
    %v81 = vsel %vm76, %v73, 0
    %v84 = vsel %vm76, %v75, 0
    %86 = vmatpush.xpose.msra.mxu0 0.0
    %87 = vmatpush.xpose.msra.mxu0 0.0
    %88 = vmatpush.xpose.msra.mxu0 0.0
    %89 = vmatpush.xpose.msra.mxu0 0.0
    %90 = vmatpush.xpose.msra.mxu0 0.0
    %91 = vmatpush.xpose.msra.mxu0 0.0
    %92 = vmatpush.xpose.msra.mxu0 0.0
    %93 = vmatpush.xpose.msra.mxu0 0.0
    %94 = vmatpush.xpose.msra.mxu0 0.0
    %95 = vmatpush.xpose.msra.mxu0 0.0
    %96 = vmatpush.xpose.msra.mxu0 0.0
    %97 = vmatpush.xpose.msra.mxu0 0.0
    %98 = vmatpush.xpose.msra.mxu0 0.0
    %99 = vmatpush.xpose.msra.mxu0 0.0
    %100 = vmatpush.xpose.msra.mxu0 0.0
    %101 = vmatpush.xpose.msra.mxu0 %v84
    %102 = vmatmul.f32.gmra.mxu0 %v78
    %v103 = vpop.f32.mrf.mxu0
    %v104 = vadd.f32 0.0, %v103
    %105 = vmatmul.f32.gmra.mxu0 %v81
    %v106 = vpop.f32.mrf.mxu0
    %v107 = vadd.f32 0.0, %v106
    %108 = vdwg.mxu0
    %v109 = vld [vmem:[%s2] sm:$0xff]
    %v111 = vsel %vm76, %v109, 0
    %113 = vmatpush.xpose.msra.mxu0 0.0
    %114 = vmatpush.xpose.msra.mxu0 0.0
    %115 = vmatpush.xpose.msra.mxu0 0.0
    %116 = vmatpush.xpose.msra.mxu0 0.0
    %117 = vmatpush.xpose.msra.mxu0 0.0
    %118 = vmatpush.xpose.msra.mxu0 0.0
    %119 = vmatpush.xpose.msra.mxu0 0.0
    %120 = vmatpush.xpose.msra.mxu0 0.0
    %121 = vmatpush.xpose.msra.mxu0 0.0
    %122 = vmatpush.xpose.msra.mxu0 0.0
    %123 = vmatpush.xpose.msra.mxu0 0.0
    %124 = vmatpush.xpose.msra.mxu0 0.0
    %125 = vmatpush.xpose.msra.mxu0 0.0
    %126 = vmatpush.xpose.msra.mxu0 0.0
    %127 = vmatpush.xpose.msra.mxu0 %v81
    %128 = vmatpush.xpose.msra.mxu0 %v78
    %129 = vmatmul.f32.gmra.mxu0 %v111
    %v130 = vpop.f32.mrf.mxu0
    %v131 = vadd.f32 0.0, %v130
    %132 = vdwg.mxu0
    %134 = vset.pattern.permute.xlu0 0
    %135 = vperm.xlu0 %134, %v104
    %v136 = vpop.permute.xlu0 %135
    %139 = vset.pattern.permute.xlu0 0
    %140 = vperm.xlu0 %139, %v107
    %v141 = vpop.permute.xlu0 %140
    %v143 = vperm.slane %v131, 0
    %v144 = vadd.f32 %v136, %v143
    %v145 = vadd.f32 %v141, %v143
    %vm146 = vcmp.gt.f32.partialorder %v144, 0.0
    %vm147 = vcmp.gt.f32.partialorder %v145, 0.0
    %v148 = vmul.f32 %v144, 0.2
    %v149 = vmul.f32 %v145, 0.2
    %v150 = vsel %vm146, %v144, %v148
    %v151 = vsel %vm147, %v145, %v149
    %vm152 = vcmp.gt.f32.partialorder %v41, 0.0
    %vm153 = vcmp.gt.f32.partialorder %v42, 0.0
    %v154 = vsel %vm152, %v150, -1e+30
    %v155 = vsel %vm153, %v151, -1e+30
    %v156 = vsel %vm45, %v154, -inf
    %157 = vmax.xlane.f32.xlu0 %v156
    %v158 = vpop.xlane.xlu0 %157
    %v159 = vsel %vm45, %v155, -inf
    %160 = vmax.xlane.f32.xlu0 %v159
    %v161 = vpop.xlane.xlu0 %160
    %v162 = vsub.f32 %v154, %v158
    %v163 = vsub.f32 %v155, %v161
    %v164 = vmul.f32 %v162, 1.442695
    %v165 = vpow.pop %v164
    %v166 = vmul.f32 %v163, 1.442695
    %v167 = vpow.pop %v166
    %v168 = vsel %vm45, %v165, 0.0
    %169 = vadd.xlane.f32.xlu0 %v168
    %v170 = vpop.xlane.xlu0 %169
    %v171 = vsel %vm45, %v167, 0.0
    %172 = vadd.xlane.f32.xlu0 %v171
    %v173 = vpop.xlane.xlu0 %172
    %v174 = vrcp.pop %v170
    %v175 = vrcp.pop %v173
    %v176 = vmul.f32 %v165, %v174
    %v177 = vmul.f32 %v167, %v175
    %v178 = vld [vmem:[%s4] sm:$0x1]
    %v180 = vperm.slane %v178, 0
    %v183 = vsel %vm45, %v176, 0
    %v186 = vsel %vm45, %v177, 0
    %188 = vmatpush.msra.mxu0 0.0
    %189 = vmatpush.msra.mxu0 0.0
    %190 = vmatpush.msra.mxu0 0.0
    %191 = vmatpush.msra.mxu0 0.0
    %192 = vmatpush.msra.mxu0 0.0
    %193 = vmatpush.msra.mxu0 0.0
    %194 = vmatpush.msra.mxu0 0.0
    %195 = vmatpush.msra.mxu0 0.0
    %196 = vmatpush.msra.mxu0 0.0
    %197 = vmatpush.msra.mxu0 0.0
    %198 = vmatpush.msra.mxu0 0.0
    %199 = vmatpush.msra.mxu0 0.0
    %200 = vmatpush.msra.mxu0 0.0
    %201 = vmatpush.msra.mxu0 0.0
    %202 = vmatpush.msra.mxu0 %v73
    %203 = vmatpush.msra.mxu0 %v70
    %204 = vmatmul.f32.gmra.mxu0 %v183
    %v205 = vpop.f32.mrf.mxu0
    %v206 = vadd.f32 %v180, %v205
    %207 = vmatmul.f32.gmra.mxu0 %v186
    %v208 = vpop.f32.mrf.mxu0
    %v209 = vadd.f32 %v180, %v208
    %210 = vdwg.mxu0
    %v211 = vmax.f32 %v206, 0.0
    %v212 = vmax.f32 %v209, 0.0
    %vm213 = vcmask 64512
    %214 = vst.msk [vmem:[#allocation2] sm:$0xff] %vm213, %v211
    %215 = vst.msk [vmem:[#allocation2 + $0x8] sm:$0xff] %vm213, %v212
    %216 = vset.pattern.permute.xlu0 1
    %217 = vperm.xlu0 %216, %v104
    %v218 = vpop.permute.xlu0 %217
    %220 = vset.pattern.permute.xlu0 1
    %221 = vperm.xlu0 %220, %v107
    %v222 = vpop.permute.xlu0 %221
    %v224 = vperm.slane %v131, 1
    %v225 = vadd.f32 %v218, %v224
    %v226 = vadd.f32 %v222, %v224
    %vm227 = vcmp.gt.f32.partialorder %v225, 0.0
    %vm228 = vcmp.gt.f32.partialorder %v226, 0.0
    %v229 = vmul.f32 %v225, 0.2
    %v230 = vmul.f32 %v226, 0.2
    %v231 = vsel %vm227, %v225, %v229
    %v232 = vsel %vm228, %v226, %v230
    %v233 = vsel %vm152, %v231, -1e+30
    %v234 = vsel %vm153, %v232, -1e+30
    %v235 = vsel %vm45, %v233, -inf
    %236 = vmax.xlane.f32.xlu0 %v235
    %v237 = vpop.xlane.xlu0 %236
    %v238 = vsel %vm45, %v234, -inf
    %239 = vmax.xlane.f32.xlu0 %v238
    %v240 = vpop.xlane.xlu0 %239
    %v241 = vsub.f32 %v233, %v237
    %v242 = vsub.f32 %v234, %v240
    %v243 = vmul.f32 %v241, 1.442695
    %v244 = vpow.pop %v243
    %v245 = vmul.f32 %v242, 1.442695
    %v246 = vpow.pop %v245
    %v247 = vsel %vm45, %v244, 0.0
    %248 = vadd.xlane.f32.xlu0 %v247
    %v249 = vpop.xlane.xlu0 %248
    %v250 = vsel %vm45, %v246, 0.0
    %251 = vadd.xlane.f32.xlu0 %v250
    %v252 = vpop.xlane.xlu0 %251
    %v253 = vrcp.pop %v249
    %v254 = vrcp.pop %v252
    %v255 = vmul.f32 %v244, %v253
    %v256 = vmul.f32 %v246, %v254
    %v257 = vld [vmem:[%s4] sm:$0x1]
    %v259 = vperm.slane %v257, 0
    %260 = vrot.lane.b32.xlu0 %v70, 120
    %v261 = vpop.permute.xlu0 %260
    %262 = vrot.lane.b32.xlu0 %v73, 120
    %v263 = vpop.permute.xlu0 %262
    %266 = vrot.lane.b32.xlu0 %v259, 120
    %v267 = vpop.permute.xlu0 %266
    %v270 = vsel %vm45, %v255, 0
    %v273 = vsel %vm45, %v256, 0
    %275 = vmatpush.msra.mxu0 0.0
    %276 = vmatpush.msra.mxu0 0.0
    %277 = vmatpush.msra.mxu0 0.0
    %278 = vmatpush.msra.mxu0 0.0
    %279 = vmatpush.msra.mxu0 0.0
    %280 = vmatpush.msra.mxu0 0.0
    %281 = vmatpush.msra.mxu0 0.0
    %282 = vmatpush.msra.mxu0 0.0
    %283 = vmatpush.msra.mxu0 0.0
    %284 = vmatpush.msra.mxu0 0.0
    %285 = vmatpush.msra.mxu0 0.0
    %286 = vmatpush.msra.mxu0 0.0
    %287 = vmatpush.msra.mxu0 0.0
    %288 = vmatpush.msra.mxu0 0.0
    %289 = vmatpush.msra.mxu0 %v263
    %290 = vmatpush.msra.mxu0 %v261
    %291 = vmatmul.f32.gmra.mxu0 %v270
    %v292 = vpop.f32.mrf.mxu0
    %v293 = vadd.f32 %v267, %v292
    %294 = vmatmul.f32.gmra.mxu0 %v273
    %v295 = vpop.f32.mrf.mxu0
    %v296 = vadd.f32 %v267, %v295
    %297 = vdwg.mxu0
    %v298 = vmax.f32 %v293, 0.0
    %v299 = vmax.f32 %v296, 0.0
    %302 = vrot.lane.b32.xlu0 %v298, 8
    %v303 = vpop.permute.xlu0 %302
    %304 = vrot.lane.b32.xlu0 %v299, 8
    %v305 = vpop.permute.xlu0 %304
    %vm308 = vcmask 130112
    %309 = vst.msk [vmem:[#allocation2] sm:$0xff] %vm308, %v303
    %310 = vst.msk [vmem:[#allocation2 + $0x8] sm:$0xff] %vm308, %v305
    %311 = vset.pattern.permute.xlu0 2
    %312 = vperm.xlu0 %311, %v104
    %v313 = vpop.permute.xlu0 %312
    %315 = vset.pattern.permute.xlu0 2
    %316 = vperm.xlu0 %315, %v107
    %v317 = vpop.permute.xlu0 %316
    %v319 = vperm.slane %v131, 2
    %v320 = vadd.f32 %v313, %v319
    %v321 = vadd.f32 %v317, %v319
    %vm322 = vcmp.gt.f32.partialorder %v320, 0.0
    %vm323 = vcmp.gt.f32.partialorder %v321, 0.0
    %v324 = vmul.f32 %v320, 0.2
    %v325 = vmul.f32 %v321, 0.2
    %v326 = vsel %vm322, %v320, %v324
    %v327 = vsel %vm323, %v321, %v325
    %v328 = vsel %vm152, %v326, -1e+30
    %v329 = vsel %vm153, %v327, -1e+30
    %v330 = vsel %vm45, %v328, -inf
    %331 = vmax.xlane.f32.xlu0 %v330
    %v332 = vpop.xlane.xlu0 %331
    %v333 = vsel %vm45, %v329, -inf
    %334 = vmax.xlane.f32.xlu0 %v333
    %v335 = vpop.xlane.xlu0 %334
    %v336 = vsub.f32 %v328, %v332
    %v337 = vsub.f32 %v329, %v335
    %v338 = vmul.f32 %v336, 1.442695
    %v339 = vpow.pop %v338
    %v340 = vmul.f32 %v337, 1.442695
    %v341 = vpow.pop %v340
    %v342 = vsel %vm45, %v339, 0.0
    %343 = vadd.xlane.f32.xlu0 %v342
    %v344 = vpop.xlane.xlu0 %343
    %v345 = vsel %vm45, %v341, 0.0
    %346 = vadd.xlane.f32.xlu0 %v345
    %v347 = vpop.xlane.xlu0 %346
    %v348 = vrcp.pop %v344
    %v349 = vrcp.pop %v347
    %v350 = vmul.f32 %v339, %v348
    %v351 = vmul.f32 %v341, %v349
    %v352 = vld [vmem:[%s4] sm:$0x1]
    %v354 = vperm.slane %v352, 0
    %355 = vrot.lane.b32.xlu0 %v70, 112
    %v356 = vpop.permute.xlu0 %355
    %357 = vrot.lane.b32.xlu0 %v73, 112
    %v358 = vpop.permute.xlu0 %357
    %361 = vrot.lane.b32.xlu0 %v354, 112
    %v362 = vpop.permute.xlu0 %361
    %v365 = vsel %vm45, %v350, 0
    %v368 = vsel %vm45, %v351, 0
    %370 = vmatpush.msra.mxu0 0.0
    %371 = vmatpush.msra.mxu0 0.0
    %372 = vmatpush.msra.mxu0 0.0
    %373 = vmatpush.msra.mxu0 0.0
    %374 = vmatpush.msra.mxu0 0.0
    %375 = vmatpush.msra.mxu0 0.0
    %376 = vmatpush.msra.mxu0 0.0
    %377 = vmatpush.msra.mxu0 0.0
    %378 = vmatpush.msra.mxu0 0.0
    %379 = vmatpush.msra.mxu0 0.0
    %380 = vmatpush.msra.mxu0 0.0
    %381 = vmatpush.msra.mxu0 0.0
    %382 = vmatpush.msra.mxu0 0.0
    %383 = vmatpush.msra.mxu0 0.0
    %384 = vmatpush.msra.mxu0 %v358
    %385 = vmatpush.msra.mxu0 %v356
    %386 = vmatmul.f32.gmra.mxu0 %v365
    %v387 = vpop.f32.mrf.mxu0
    %v388 = vadd.f32 %v362, %v387
    %389 = vmatmul.f32.gmra.mxu0 %v368
    %v390 = vpop.f32.mrf.mxu0
    %v391 = vadd.f32 %v362, %v390
    %392 = vdwg.mxu0
    %v393 = vmax.f32 %v388, 0.0
    %v394 = vmax.f32 %v391, 0.0
    %397 = vrot.lane.b32.xlu0 %v393, 16
    %v398 = vpop.permute.xlu0 %397
    %399 = vrot.lane.b32.xlu0 %v394, 16
    %v400 = vpop.permute.xlu0 %399
    %vm403 = vcmask 195712
    %404 = vst.msk [vmem:[#allocation2] sm:$0xff] %vm403, %v398
    %405 = vst.msk [vmem:[#allocation2 + $0x8] sm:$0xff] %vm403, %v400
    %406 = vset.pattern.permute.xlu0 3
    %407 = vperm.xlu0 %406, %v104
    %v408 = vpop.permute.xlu0 %407
    %410 = vset.pattern.permute.xlu0 3
    %411 = vperm.xlu0 %410, %v107
    %v412 = vpop.permute.xlu0 %411
    %v414 = vperm.slane %v131, 3
    %v415 = vadd.f32 %v408, %v414
    %v416 = vadd.f32 %v412, %v414
    %vm417 = vcmp.gt.f32.partialorder %v415, 0.0
    %vm418 = vcmp.gt.f32.partialorder %v416, 0.0
    %v419 = vmul.f32 %v415, 0.2
    %v420 = vmul.f32 %v416, 0.2
    %v421 = vsel %vm417, %v415, %v419
    %v422 = vsel %vm418, %v416, %v420
    %v423 = vsel %vm152, %v421, -1e+30
    %v424 = vsel %vm153, %v422, -1e+30
    %v425 = vsel %vm45, %v423, -inf
    %426 = vmax.xlane.f32.xlu0 %v425
    %v427 = vpop.xlane.xlu0 %426
    %v428 = vsel %vm45, %v424, -inf
    %429 = vmax.xlane.f32.xlu0 %v428
    %v430 = vpop.xlane.xlu0 %429
    %v431 = vsub.f32 %v423, %v427
    %v432 = vsub.f32 %v424, %v430
    %v433 = vmul.f32 %v431, 1.442695
    %v434 = vpow.pop %v433
    %v435 = vmul.f32 %v432, 1.442695
    %v436 = vpow.pop %v435
    %v437 = vsel %vm45, %v434, 0.0
    %438 = vadd.xlane.f32.xlu0 %v437
    %v439 = vpop.xlane.xlu0 %438
    %v440 = vsel %vm45, %v436, 0.0
    %441 = vadd.xlane.f32.xlu0 %v440
    %v442 = vpop.xlane.xlu0 %441
    %v443 = vrcp.pop %v439
    %v444 = vrcp.pop %v442
    %v445 = vmul.f32 %v434, %v443
    %v446 = vmul.f32 %v436, %v444
    %v447 = vld [vmem:[%s4] sm:$0x1]
    %v449 = vperm.slane %v447, 0
    %450 = vrot.lane.b32.xlu0 %v70, 104
    %v451 = vpop.permute.xlu0 %450
    %452 = vrot.lane.b32.xlu0 %v73, 104
    %v453 = vpop.permute.xlu0 %452
    %456 = vrot.lane.b32.xlu0 %v449, 104
    %v457 = vpop.permute.xlu0 %456
    %v460 = vsel %vm45, %v445, 0
    %v463 = vsel %vm45, %v446, 0
    %465 = vmatpush.msra.mxu0 0.0
    %466 = vmatpush.msra.mxu0 0.0
    %467 = vmatpush.msra.mxu0 0.0
    %468 = vmatpush.msra.mxu0 0.0
    %469 = vmatpush.msra.mxu0 0.0
    %470 = vmatpush.msra.mxu0 0.0
    %471 = vmatpush.msra.mxu0 0.0
    %472 = vmatpush.msra.mxu0 0.0
    %473 = vmatpush.msra.mxu0 0.0
    %474 = vmatpush.msra.mxu0 0.0
    %475 = vmatpush.msra.mxu0 0.0
    %476 = vmatpush.msra.mxu0 0.0
    %477 = vmatpush.msra.mxu0 0.0
    %478 = vmatpush.msra.mxu0 0.0
    %479 = vmatpush.msra.mxu0 %v453
    %480 = vmatpush.msra.mxu0 %v451
    %481 = vmatmul.f32.gmra.mxu0 %v460
    %v482 = vpop.f32.mrf.mxu0
    %v483 = vadd.f32 %v457, %v482
    %484 = vmatmul.f32.gmra.mxu0 %v463
    %v485 = vpop.f32.mrf.mxu0
    %v486 = vadd.f32 %v457, %v485
    %487 = vdwg.mxu0
    %v488 = vmax.f32 %v483, 0.0
    %v489 = vmax.f32 %v486, 0.0
    %492 = vrot.lane.b32.xlu0 %v488, 24
    %v493 = vpop.permute.xlu0 %492
    %494 = vrot.lane.b32.xlu0 %v489, 24
    %v495 = vpop.permute.xlu0 %494
    %vm498 = vcmask 261312
    %499 = vst.msk [vmem:[#allocation2] sm:$0xff] %vm498, %v493
    %500 = vst.msk [vmem:[#allocation2 + $0x8] sm:$0xff] %vm498, %v495
    %501 = vset.pattern.permute.xlu0 4
    %502 = vperm.xlu0 %501, %v104
    %v503 = vpop.permute.xlu0 %502
    %505 = vset.pattern.permute.xlu0 4
    %506 = vperm.xlu0 %505, %v107
    %v507 = vpop.permute.xlu0 %506
    %v509 = vperm.slane %v131, 4
    %v510 = vadd.f32 %v503, %v509
    %v511 = vadd.f32 %v507, %v509
    %vm512 = vcmp.gt.f32.partialorder %v510, 0.0
    %vm513 = vcmp.gt.f32.partialorder %v511, 0.0
    %v514 = vmul.f32 %v510, 0.2
    %v515 = vmul.f32 %v511, 0.2
    %v516 = vsel %vm512, %v510, %v514
    %v517 = vsel %vm513, %v511, %v515
    %v518 = vsel %vm152, %v516, -1e+30
    %v519 = vsel %vm153, %v517, -1e+30
    %v520 = vsel %vm45, %v518, -inf
    %521 = vmax.xlane.f32.xlu0 %v520
    %v522 = vpop.xlane.xlu0 %521
    %v523 = vsel %vm45, %v519, -inf
    %524 = vmax.xlane.f32.xlu0 %v523
    %v525 = vpop.xlane.xlu0 %524
    %v526 = vsub.f32 %v518, %v522
    %v527 = vsub.f32 %v519, %v525
    %v528 = vmul.f32 %v526, 1.442695
    %v529 = vpow.pop %v528
    %v530 = vmul.f32 %v527, 1.442695
    %v531 = vpow.pop %v530
    %v532 = vsel %vm45, %v529, 0.0
    %533 = vadd.xlane.f32.xlu0 %v532
    %v534 = vpop.xlane.xlu0 %533
    %v535 = vsel %vm45, %v531, 0.0
    %536 = vadd.xlane.f32.xlu0 %v535
    %v537 = vpop.xlane.xlu0 %536
    %v538 = vrcp.pop %v534
    %v539 = vrcp.pop %v537
    %v540 = vmul.f32 %v529, %v538
    %v541 = vmul.f32 %v531, %v539
    %v542 = vld [vmem:[%s4] sm:$0x1]
    %v544 = vperm.slane %v542, 0
    %545 = vrot.lane.b32.xlu0 %v70, 96
    %v546 = vpop.permute.xlu0 %545
    %547 = vrot.lane.b32.xlu0 %v73, 96
    %v548 = vpop.permute.xlu0 %547
    %551 = vrot.lane.b32.xlu0 %v544, 96
    %v552 = vpop.permute.xlu0 %551
    %v555 = vsel %vm45, %v540, 0
    %v558 = vsel %vm45, %v541, 0
    %560 = vmatpush.msra.mxu0 0.0
    %561 = vmatpush.msra.mxu0 0.0
    %562 = vmatpush.msra.mxu0 0.0
    %563 = vmatpush.msra.mxu0 0.0
    %564 = vmatpush.msra.mxu0 0.0
    %565 = vmatpush.msra.mxu0 0.0
    %566 = vmatpush.msra.mxu0 0.0
    %567 = vmatpush.msra.mxu0 0.0
    %568 = vmatpush.msra.mxu0 0.0
    %569 = vmatpush.msra.mxu0 0.0
    %570 = vmatpush.msra.mxu0 0.0
    %571 = vmatpush.msra.mxu0 0.0
    %572 = vmatpush.msra.mxu0 0.0
    %573 = vmatpush.msra.mxu0 0.0
    %574 = vmatpush.msra.mxu0 %v548
    %575 = vmatpush.msra.mxu0 %v546
    %576 = vmatmul.f32.gmra.mxu0 %v555
    %v577 = vpop.f32.mrf.mxu0
    %v578 = vadd.f32 %v552, %v577
    %579 = vmatmul.f32.gmra.mxu0 %v558
    %v580 = vpop.f32.mrf.mxu0
    %v581 = vadd.f32 %v552, %v580
    %582 = vdwg.mxu0
    %v583 = vmax.f32 %v578, 0.0
    %v584 = vmax.f32 %v581, 0.0
    %587 = vrot.lane.b32.xlu0 %v583, 32
    %v588 = vpop.permute.xlu0 %587
    %589 = vrot.lane.b32.xlu0 %v584, 32
    %v590 = vpop.permute.xlu0 %589
    %vm593 = vcmask 326912
    %594 = vst.msk [vmem:[#allocation2] sm:$0xff] %vm593, %v588
    %595 = vst.msk [vmem:[#allocation2 + $0x8] sm:$0xff] %vm593, %v590
    %596 = vset.pattern.permute.xlu0 5
    %597 = vperm.xlu0 %596, %v104
    %v598 = vpop.permute.xlu0 %597
    %600 = vset.pattern.permute.xlu0 5
    %601 = vperm.xlu0 %600, %v107
    %v602 = vpop.permute.xlu0 %601
    %v604 = vperm.slane %v131, 5
    %v605 = vadd.f32 %v598, %v604
    %v606 = vadd.f32 %v602, %v604
    %vm607 = vcmp.gt.f32.partialorder %v605, 0.0
    %vm608 = vcmp.gt.f32.partialorder %v606, 0.0
    %v609 = vmul.f32 %v605, 0.2
    %v610 = vmul.f32 %v606, 0.2
    %v611 = vsel %vm607, %v605, %v609
    %v612 = vsel %vm608, %v606, %v610
    %v613 = vsel %vm152, %v611, -1e+30
    %v614 = vsel %vm153, %v612, -1e+30
    %v615 = vsel %vm45, %v613, -inf
    %616 = vmax.xlane.f32.xlu0 %v615
    %v617 = vpop.xlane.xlu0 %616
    %v618 = vsel %vm45, %v614, -inf
    %619 = vmax.xlane.f32.xlu0 %v618
    %v620 = vpop.xlane.xlu0 %619
    %v621 = vsub.f32 %v613, %v617
    %v622 = vsub.f32 %v614, %v620
    %v623 = vmul.f32 %v621, 1.442695
    %v624 = vpow.pop %v623
    %v625 = vmul.f32 %v622, 1.442695
    %v626 = vpow.pop %v625
    %v627 = vsel %vm45, %v624, 0.0
    %628 = vadd.xlane.f32.xlu0 %v627
    %v629 = vpop.xlane.xlu0 %628
    %v630 = vsel %vm45, %v626, 0.0
    %631 = vadd.xlane.f32.xlu0 %v630
    %v632 = vpop.xlane.xlu0 %631
    %v633 = vrcp.pop %v629
    %v634 = vrcp.pop %v632
    %v635 = vmul.f32 %v624, %v633
    %v636 = vmul.f32 %v626, %v634
    %v637 = vld [vmem:[%s4] sm:$0x1]
    %v639 = vperm.slane %v637, 0
    %640 = vrot.lane.b32.xlu0 %v70, 88
    %v641 = vpop.permute.xlu0 %640
    %642 = vrot.lane.b32.xlu0 %v73, 88
    %v643 = vpop.permute.xlu0 %642
    %646 = vrot.lane.b32.xlu0 %v639, 88
    %v647 = vpop.permute.xlu0 %646
    %v650 = vsel %vm45, %v635, 0
    %v653 = vsel %vm45, %v636, 0
    %655 = vmatpush.msra.mxu0 0.0
    %656 = vmatpush.msra.mxu0 0.0
    %657 = vmatpush.msra.mxu0 0.0
    %658 = vmatpush.msra.mxu0 0.0
    %659 = vmatpush.msra.mxu0 0.0
    %660 = vmatpush.msra.mxu0 0.0
    %661 = vmatpush.msra.mxu0 0.0
    %662 = vmatpush.msra.mxu0 0.0
    %663 = vmatpush.msra.mxu0 0.0
    %664 = vmatpush.msra.mxu0 0.0
    %665 = vmatpush.msra.mxu0 0.0
    %666 = vmatpush.msra.mxu0 0.0
    %667 = vmatpush.msra.mxu0 0.0
    %668 = vmatpush.msra.mxu0 0.0
    %669 = vmatpush.msra.mxu0 %v643
    %670 = vmatpush.msra.mxu0 %v641
    %671 = vmatmul.f32.gmra.mxu0 %v650
    %v672 = vpop.f32.mrf.mxu0
    %v673 = vadd.f32 %v647, %v672
    %674 = vmatmul.f32.gmra.mxu0 %v653
    %v675 = vpop.f32.mrf.mxu0
    %v676 = vadd.f32 %v647, %v675
    %677 = vdwg.mxu0
    %v678 = vmax.f32 %v673, 0.0
    %v679 = vmax.f32 %v676, 0.0
    %682 = vrot.lane.b32.xlu0 %v678, 40
    %v683 = vpop.permute.xlu0 %682
    %684 = vrot.lane.b32.xlu0 %v679, 40
    %v685 = vpop.permute.xlu0 %684
    %vm688 = vcmask 392512
    %689 = vst.msk [vmem:[#allocation2] sm:$0xff] %vm688, %v683
    %690 = vst.msk [vmem:[#allocation2 + $0x8] sm:$0xff] %vm688, %v685
    %691 = vset.pattern.permute.xlu0 6
    %692 = vperm.xlu0 %691, %v104
    %v693 = vpop.permute.xlu0 %692
    %695 = vset.pattern.permute.xlu0 6
    %696 = vperm.xlu0 %695, %v107
    %v697 = vpop.permute.xlu0 %696
    %v699 = vperm.slane %v131, 6
    %v700 = vadd.f32 %v693, %v699
    %v701 = vadd.f32 %v697, %v699
    %vm702 = vcmp.gt.f32.partialorder %v700, 0.0
    %vm703 = vcmp.gt.f32.partialorder %v701, 0.0
    %v704 = vmul.f32 %v700, 0.2
    %v705 = vmul.f32 %v701, 0.2
    %v706 = vsel %vm702, %v700, %v704
    %v707 = vsel %vm703, %v701, %v705
    %v708 = vsel %vm152, %v706, -1e+30
    %v709 = vsel %vm153, %v707, -1e+30
    %v710 = vsel %vm45, %v708, -inf
    %711 = vmax.xlane.f32.xlu0 %v710
    %v712 = vpop.xlane.xlu0 %711
    %v713 = vsel %vm45, %v709, -inf
    %714 = vmax.xlane.f32.xlu0 %v713
    %v715 = vpop.xlane.xlu0 %714
    %v716 = vsub.f32 %v708, %v712
    %v717 = vsub.f32 %v709, %v715
    %v718 = vmul.f32 %v716, 1.442695
    %v719 = vpow.pop %v718
    %v720 = vmul.f32 %v717, 1.442695
    %v721 = vpow.pop %v720
    %v722 = vsel %vm45, %v719, 0.0
    %723 = vadd.xlane.f32.xlu0 %v722
    %v724 = vpop.xlane.xlu0 %723
    %v725 = vsel %vm45, %v721, 0.0
    %726 = vadd.xlane.f32.xlu0 %v725
    %v727 = vpop.xlane.xlu0 %726
    %v728 = vrcp.pop %v724
    %v729 = vrcp.pop %v727
    %v730 = vmul.f32 %v719, %v728
    %v731 = vmul.f32 %v721, %v729
    %v732 = vld [vmem:[%s4] sm:$0x1]
    %v734 = vperm.slane %v732, 0
    %735 = vrot.lane.b32.xlu0 %v70, 80
    %v736 = vpop.permute.xlu0 %735
    %737 = vrot.lane.b32.xlu0 %v73, 80
    %v738 = vpop.permute.xlu0 %737
    %741 = vrot.lane.b32.xlu0 %v734, 80
    %v742 = vpop.permute.xlu0 %741
    %v745 = vsel %vm45, %v730, 0
    %v748 = vsel %vm45, %v731, 0
    %750 = vmatpush.msra.mxu0 0.0
    %751 = vmatpush.msra.mxu0 0.0
    %752 = vmatpush.msra.mxu0 0.0
    %753 = vmatpush.msra.mxu0 0.0
    %754 = vmatpush.msra.mxu0 0.0
    %755 = vmatpush.msra.mxu0 0.0
    %756 = vmatpush.msra.mxu0 0.0
    %757 = vmatpush.msra.mxu0 0.0
    %758 = vmatpush.msra.mxu0 0.0
    %759 = vmatpush.msra.mxu0 0.0
    %760 = vmatpush.msra.mxu0 0.0
    %761 = vmatpush.msra.mxu0 0.0
    %762 = vmatpush.msra.mxu0 0.0
    %763 = vmatpush.msra.mxu0 0.0
    %764 = vmatpush.msra.mxu0 %v738
    %765 = vmatpush.msra.mxu0 %v736
    %766 = vmatmul.f32.gmra.mxu0 %v745
    %v767 = vpop.f32.mrf.mxu0
    %v768 = vadd.f32 %v742, %v767
    %769 = vmatmul.f32.gmra.mxu0 %v748
    %v770 = vpop.f32.mrf.mxu0
    %v771 = vadd.f32 %v742, %v770
    %772 = vdwg.mxu0
    %v773 = vmax.f32 %v768, 0.0
    %v774 = vmax.f32 %v771, 0.0
    %777 = vrot.lane.b32.xlu0 %v773, 48
    %v778 = vpop.permute.xlu0 %777
    %779 = vrot.lane.b32.xlu0 %v774, 48
    %v780 = vpop.permute.xlu0 %779
    %vm783 = vcmask 458112
    %784 = vst.msk [vmem:[#allocation2] sm:$0xff] %vm783, %v778
    %785 = vst.msk [vmem:[#allocation2 + $0x8] sm:$0xff] %vm783, %v780
    %786 = vset.pattern.permute.xlu0 7
    %787 = vperm.xlu0 %786, %v104
    %v788 = vpop.permute.xlu0 %787
    %790 = vset.pattern.permute.xlu0 7
    %791 = vperm.xlu0 %790, %v107
    %v792 = vpop.permute.xlu0 %791
    %v794 = vperm.slane %v131, 7
    %v795 = vadd.f32 %v788, %v794
    %v796 = vadd.f32 %v792, %v794
    %vm797 = vcmp.gt.f32.partialorder %v795, 0.0
    %vm798 = vcmp.gt.f32.partialorder %v796, 0.0
    %v799 = vmul.f32 %v795, 0.2
    %v800 = vmul.f32 %v796, 0.2
    %v801 = vsel %vm797, %v795, %v799
    %v802 = vsel %vm798, %v796, %v800
    %v803 = vsel %vm152, %v801, -1e+30
    %v804 = vsel %vm153, %v802, -1e+30
    %v805 = vsel %vm45, %v803, -inf
    %806 = vmax.xlane.f32.xlu0 %v805
    %v807 = vpop.xlane.xlu0 %806
    %v808 = vsel %vm45, %v804, -inf
    %809 = vmax.xlane.f32.xlu0 %v808
    %v810 = vpop.xlane.xlu0 %809
    %v811 = vsub.f32 %v803, %v807
    %v812 = vsub.f32 %v804, %v810
    %v813 = vmul.f32 %v811, 1.442695
    %v814 = vpow.pop %v813
    %v815 = vmul.f32 %v812, 1.442695
    %v816 = vpow.pop %v815
    %v817 = vsel %vm45, %v814, 0.0
    %818 = vadd.xlane.f32.xlu0 %v817
    %v819 = vpop.xlane.xlu0 %818
    %v820 = vsel %vm45, %v816, 0.0
    %821 = vadd.xlane.f32.xlu0 %v820
    %v822 = vpop.xlane.xlu0 %821
    %v823 = vrcp.pop %v819
    %v824 = vrcp.pop %v822
    %v825 = vmul.f32 %v814, %v823
    %v826 = vmul.f32 %v816, %v824
    %v827 = vld [vmem:[%s4] sm:$0x1]
    %v829 = vperm.slane %v827, 0
    %830 = vrot.lane.b32.xlu0 %v70, 72
    %v831 = vpop.permute.xlu0 %830
    %832 = vrot.lane.b32.xlu0 %v73, 72
    %v833 = vpop.permute.xlu0 %832
    %836 = vrot.lane.b32.xlu0 %v829, 72
    %v837 = vpop.permute.xlu0 %836
    %v840 = vsel %vm45, %v825, 0
    %v843 = vsel %vm45, %v826, 0
    %845 = vmatpush.msra.mxu0 0.0
    %846 = vmatpush.msra.mxu0 0.0
    %847 = vmatpush.msra.mxu0 0.0
    %848 = vmatpush.msra.mxu0 0.0
    %849 = vmatpush.msra.mxu0 0.0
    %850 = vmatpush.msra.mxu0 0.0
    %851 = vmatpush.msra.mxu0 0.0
    %852 = vmatpush.msra.mxu0 0.0
    %853 = vmatpush.msra.mxu0 0.0
    %854 = vmatpush.msra.mxu0 0.0
    %855 = vmatpush.msra.mxu0 0.0
    %856 = vmatpush.msra.mxu0 0.0
    %857 = vmatpush.msra.mxu0 0.0
    %858 = vmatpush.msra.mxu0 0.0
    %859 = vmatpush.msra.mxu0 %v833
    %860 = vmatpush.msra.mxu0 %v831
    %861 = vmatmul.f32.gmra.mxu0 %v840
    %v862 = vpop.f32.mrf.mxu0
    %v863 = vadd.f32 %v837, %v862
    %864 = vmatmul.f32.gmra.mxu0 %v843
    %v865 = vpop.f32.mrf.mxu0
    %v866 = vadd.f32 %v837, %v865
    %867 = vdwg.mxu0
    %v868 = vmax.f32 %v863, 0.0
    %v869 = vmax.f32 %v866, 0.0
    %872 = vrot.lane.b32.xlu0 %v868, 56
    %v873 = vpop.permute.xlu0 %872
    %874 = vrot.lane.b32.xlu0 %v869, 56
    %v875 = vpop.permute.xlu0 %874
    %vm878 = vcmask 523712
    %879 = vst.msk [vmem:[#allocation2] sm:$0xff] %vm878, %v873
    %880 = vst.msk [vmem:[#allocation2 + $0x8] sm:$0xff] %vm878, %v875
    %v881 = vld [vmem:[#allocation2] sm:$0xff]
    %v882 = vld [vmem:[#allocation2 + $0x8] sm:$0xff]
    %v883 = vld [vmem:[%s5] sm:$0xff]
    %v884 = vld [vmem:[%s5 + $0x8] sm:$0xff]
    %v885 = vld [vmem:[%s5 + $0x10] sm:$0xff]
    %v886 = vld [vmem:[%s5 + $0x18] sm:$0xff]
    %v887 = vld [vmem:[%s5 + $0x20] sm:$0xff]
    %v888 = vld [vmem:[%s5 + $0x28] sm:$0xff]
    %v889 = vld [vmem:[%s5 + $0x30] sm:$0xff]
    %v890 = vld [vmem:[%s5 + $0x38] sm:$0xff]
    %v892 = vsel %vm76, %v881, 0
    %v895 = vsel %vm76, %v882, 0
    %897 = vmatpush.msra.mxu0 0.0
    %898 = vmatpush.msra.mxu0 0.0
    %899 = vmatpush.msra.mxu0 0.0
    %900 = vmatpush.msra.mxu0 0.0
    %901 = vmatpush.msra.mxu0 0.0
    %902 = vmatpush.msra.mxu0 0.0
    %903 = vmatpush.msra.mxu0 0.0
    %904 = vmatpush.msra.mxu0 0.0
    %905 = vmatpush.msra.mxu0 %v890
    %906 = vmatpush.msra.mxu0 %v889
    %907 = vmatpush.msra.mxu0 %v888
    %908 = vmatpush.msra.mxu0 %v887
    %909 = vmatpush.msra.mxu0 %v886
    %910 = vmatpush.msra.mxu0 %v885
    %911 = vmatpush.msra.mxu0 %v884
    %912 = vmatpush.msra.mxu0 %v883
    %913 = vmatmul.f32.gmra.mxu0 %v892
    %v914 = vpop.f32.mrf.mxu0
    %v915 = vadd.f32 0.0, %v914
    %916 = vmatmul.f32.gmra.mxu0 %v895
    %v917 = vpop.f32.mrf.mxu0
    %v918 = vadd.f32 0.0, %v917
    %919 = vdwg.mxu0
    %v920 = vld [vmem:[%s7] sm:$0x1]
    %v922 = vperm.slane %v920, 0
    %v924 = vmul.f32 %v915, %v922
    %v925 = vmul.f32 %v918, %v922
    %926 = vadd.xlane.f32.xlu0 %v924
    %v927 = vpop.xlane.xlu0 %926
    %928 = vadd.xlane.f32.xlu0 %v925
    %v929 = vpop.xlane.xlu0 %928
    %v930 = vld [vmem:[%s6] sm:$0x1]
    %931 = vmatpush.xpose.msra.mxu0 0.0
    %932 = vmatpush.xpose.msra.mxu0 0.0
    %933 = vmatpush.xpose.msra.mxu0 0.0
    %934 = vmatpush.xpose.msra.mxu0 0.0
    %935 = vmatpush.xpose.msra.mxu0 0.0
    %936 = vmatpush.xpose.msra.mxu0 0.0
    %937 = vmatpush.xpose.msra.mxu0 0.0
    %938 = vmatpush.xpose.msra.mxu0 0.0
    %939 = vmatpush.xpose.msra.mxu0 0.0
    %940 = vmatpush.xpose.msra.mxu0 0.0
    %941 = vmatpush.xpose.msra.mxu0 0.0
    %942 = vmatpush.xpose.msra.mxu0 0.0
    %943 = vmatpush.xpose.msra.mxu0 0.0
    %944 = vmatpush.xpose.msra.mxu0 0.0
    %945 = vmatpush.xpose.msra.mxu0 %v918
    %946 = vmatpush.xpose.msra.mxu0 %v915
    %947 = vmatmul.f32.gmra.mxu0 %v930
    %v948 = vpop.f32.mrf.mxu0
    %v949 = vadd.f32 0.0, %v948
    %950 = vdwg.mxu0
    %v951 = vperm.slane %v949, 0
    %v952 = vadd.f32 %v927, %v951
    %v953 = vadd.f32 %v929, %v951
    %vm954 = vcmp.gt.f32.partialorder %v952, 0.0
    %vm955 = vcmp.gt.f32.partialorder %v953, 0.0
    %v956 = vmul.f32 %v952, 0.2
    %v957 = vmul.f32 %v953, 0.2
    %v958 = vsel %vm954, %v952, %v956
    %v959 = vsel %vm955, %v953, %v957
    %v960 = vsel %vm152, %v958, -1e+30
    %v961 = vsel %vm153, %v959, -1e+30
    %v962 = vsel %vm45, %v960, -inf
    %963 = vmax.xlane.f32.xlu0 %v962
    %v964 = vpop.xlane.xlu0 %963
    %v965 = vsel %vm45, %v961, -inf
    %966 = vmax.xlane.f32.xlu0 %v965
    %v967 = vpop.xlane.xlu0 %966
    %v968 = vsub.f32 %v960, %v964
    %v969 = vsub.f32 %v961, %v967
    %v970 = vmul.f32 %v968, 1.442695
    %v971 = vpow.pop %v970
    %v972 = vmul.f32 %v969, 1.442695
    %v973 = vpow.pop %v972
    %v974 = vsel %vm45, %v971, 0.0
    %975 = vadd.xlane.f32.xlu0 %v974
    %v976 = vpop.xlane.xlu0 %975
    %v977 = vsel %vm45, %v973, 0.0
    %978 = vadd.xlane.f32.xlu0 %v977
    %v979 = vpop.xlane.xlu0 %978
    %v980 = vrcp.pop %v976
    %v981 = vrcp.pop %v979
    %v982 = vmul.f32 %v971, %v980
    %v983 = vmul.f32 %v973, %v981
    %v984 = vld [vmem:[%s8] sm:$0x1]
    %v986 = vperm.slane %v984, 0
    %v989 = vsel %vm45, %v982, 0
    %v992 = vsel %vm45, %v983, 0
    %994 = vmatpush.msra.mxu0 0.0
    %995 = vmatpush.msra.mxu0 0.0
    %996 = vmatpush.msra.mxu0 0.0
    %997 = vmatpush.msra.mxu0 0.0
    %998 = vmatpush.msra.mxu0 0.0
    %999 = vmatpush.msra.mxu0 0.0
    %1000 = vmatpush.msra.mxu0 0.0
    %1001 = vmatpush.msra.mxu0 0.0
    %1002 = vmatpush.msra.mxu0 0.0
    %1003 = vmatpush.msra.mxu0 0.0
    %1004 = vmatpush.msra.mxu0 0.0
    %1005 = vmatpush.msra.mxu0 0.0
    %1006 = vmatpush.msra.mxu0 0.0
    %1007 = vmatpush.msra.mxu0 0.0
    %1008 = vmatpush.msra.mxu0 %v918
    %1009 = vmatpush.msra.mxu0 %v915
    %1010 = vmatmul.f32.gmra.mxu0 %v989
    %v1011 = vpop.f32.mrf.mxu0
    %v1012 = vadd.f32 %v986, %v1011
    %1013 = vmatmul.f32.gmra.mxu0 %v992
    %v1014 = vpop.f32.mrf.mxu0
    %v1015 = vadd.f32 %v986, %v1014
    %1016 = vdwg.mxu0
    %v1017 = vld [vmem:[%s10] sm:$0x3]
    %v1019 = vsel %vm45, %v1017, 0
    %1021 = vmatpush.msra.mxu0 0.0
    %1022 = vmatpush.msra.mxu0 0.0
    %1023 = vmatpush.msra.mxu0 0.0
    %1024 = vmatpush.msra.mxu0 0.0
    %1025 = vmatpush.msra.mxu0 0.0
    %1026 = vmatpush.msra.mxu0 0.0
    %1027 = vmatpush.msra.mxu0 0.0
    %1028 = vmatpush.msra.mxu0 0.0
    %1029 = vmatpush.msra.mxu0 0.0
    %1030 = vmatpush.msra.mxu0 0.0
    %1031 = vmatpush.msra.mxu0 0.0
    %1032 = vmatpush.msra.mxu0 0.0
    %1033 = vmatpush.msra.mxu0 0.0
    %1034 = vmatpush.msra.mxu0 0.0
    %1035 = vmatpush.msra.mxu0 %v1015
    %1036 = vmatpush.msra.mxu0 %v1012
    %1037 = vmatmul.f32.gmra.mxu0 %v1019
    %v1038 = vpop.f32.mrf.mxu0
    %v1039 = vadd.f32 0.0, %v1038
    %1040 = vdwg.mxu0
    %v1041 = vlaneseq
    %v1042 = vand.u32 %v1041, 127
    %vm1043 = vcmp.lt.s32.totalorder %v1042, 2
    %v1044 = vsel %vm1043, %v1039, -1e+30
    %vm1045 = vcmask 1041408
    %v1046 = vsel %vm1045, %v1044, -inf
    %1047 = vmax.xlane.f32.xlu0 %v1046
    %v1048 = vpop.xlane.xlu0 %1047
    %v1049 = vsub.f32 %v1044, %v1048
    %v1050 = vmul.f32 %v1049, 1.442695
    %v1051 = vpow.pop %v1050
    %v1052 = vsel %vm1045, %v1051, 0.0
    %1053 = vadd.xlane.f32.xlu0 %v1052
    %v1054 = vpop.xlane.xlu0 %1053
    %v1055 = vlog2.pop %v1054
    %v1056 = vmul.f32 %v1055, 0.6931472
    %v1057 = vsub.f32 %v1049, %v1056
    %1058 = vst [vmem:[#allocation3] sm:$0x3] %v1057
    // Predicated region
    $region46: #{bin_classifier_forward.1} parent=1 // pred_check
      _
    $region47: #{bin_classifier_forward.1} parent=1 // pred_check_branch
      %1060 = sbr.rel (0) target = $region49
    $region48: #{bin_classifier_forward.1} parent=1 // pred_region
      %1062 = vsyncadd [#allocation4], 0
      %s1064 = sshll.u32 [#allocation3], 4
      %s1065 = int_to_ptr.vmem [resolvable:$true] %s1064
      %s1066 = sshll.u32 %s11, 4
      %s1067 = int_to_ptr.hbm [resolvable:$true] %s1066
      %1069 = dma.vmem_to_hbm [thread:$0]  %s1065, 32, %s1067, [#allocation4]
    $region49: #{bin_classifier_forward.1} parent=1 // pred_fallthru
      _
    // Predicated region
    $region50: #{bin_classifier_forward.1} parent=1 // pred_check
      _
    $region51: #{bin_classifier_forward.1} parent=1 // pred_check_branch
      %1071 = sbr.rel (0) target = $region53
    $region52: #{bin_classifier_forward.1} parent=1 // pred_region
      %1073 = dma.done [#allocation4], 32
    $region53: #{bin_classifier_forward.1} parent=1 // pred_fallthru
      _
    %1074 = vsyncpa [#allocation4], 1

</llo_original>
